<compile_context>
chip_gen: v5e
topology: v5e:2x2
jax: 0.10.0
libtpu: 0.0.40
codegen_flags: <defaults>
</compile_context>

<pallas_src>
import functools

import jax
import jax.numpy as jnp
from jax.experimental import pallas as pl
from jax.experimental.pallas import tpu as pltpu


def _round_up(x, m):
    return ((x + m - 1) // m) * m


def _vmem_limit_bytes():
    """Per-generation VMEM budget (v7x: 64 MiB total; v5e/v6e: 128 MiB)."""
    cap = 64 * 1024 * 1024
    try:
        info = pltpu.get_tpu_info()
        cap = int(getattr(info, "vmem_capacity_bytes", cap))
    except Exception:
        pass
    return int(min(cap * 3 // 4, 100 * 1024 * 1024))


# ----------------------------------------------------------------------------
# Kernel: fused 3x3 conv (pad=1) + bias + ReLU on one flattened-spatial tile.
#
#   x_ref    : (1, Cp, TP)     bf16  main slab of the flattened padded image
#   halo_ref : (1, Cp, HALO)   bf16  next HALO source columns (conv halo)
#   w_ref    : (Cout, 9*Cp)    bf16  taps stacked along the contraction dim
#   b_ref    : (Cout, 1)       f32   bias
#   o_ref    : (1, Cout, TP)   out   lane-dense output (spatial on lanes)
#   stk_ref  : (9*Cp, TP)      bf16  VMEM scratch: stacked lane-shifted operand
#
# Source column q of the flattened padded image is padded pixel (q//Wp, q%Wp);
# output position p of tap (kh, kw) reads source column p + kh*Wp + kw, i.e. a
# static lane shift.  All 9 shifted slices are written into one (9*Cp, TP)
# operand and contracted in a SINGLE MXU matmul (K = 9*Cp): the MXU contraction
# dim is filled and the 8 accumulator read-modify-write passes of the per-tap
# formulation disappear.
# ----------------------------------------------------------------------------
def _conv3x3_bias_relu_kernel(x_ref, halo_ref, w_ref, b_ref, o_ref, stk_ref,
                              *, wp, cp):
    tp = o_ref.shape[-1]
    x = x_ref[0]            # (Cp, TP)
    h = halo_ref[0]         # (Cp, HALO)

    # Build the stacked, lane-shifted operand directly in VMEM scratch.
    for kh in range(3):
        for kw in range(3):
            t = kh * 3 + kw
            off = kh * wp + kw                      # static shift, <= 2*Wp+2 <= HALO
            if off == 0:
                stk_ref[0:cp, :] = x
            else:
                stk_ref[t * cp:(t + 1) * cp, 0:tp - off] = x[:, off:]
                stk_ref[t * cp:(t + 1) * cp, tp - off:tp] = h[:, 0:off]

    acc = jnp.dot(w_ref[...], stk_ref[...],          # one MXU matmul, K = 9*Cp
                  preferred_element_type=jnp.float32)          # (Cout, TP) f32
    acc = acc + b_ref[...]                                      # f32 epilogue (v5e-safe)
    o_ref[0] = jnp.maximum(acc, 0.0).astype(o_ref.dtype)


def conv3x3_relu_pallas(x, weight, bias, *, out_dtype=jnp.bfloat16,
                        single_buffer_consts=True):
    """x: (N, Cin, H, W) f32 NCHW.  weight: (Cout, Cin, 3, 3).  bias: (Cout,).

    Returns (N, Cout, H, W) in `out_dtype` (default bf16 output: halves HBM
    writeback / vst pressure; bias+ReLU math stays in f32)."""
    N, C, H, W = x.shape
    Cout = weight.shape[0]
    Hp, Wp = H + 2, W + 2                           # SAME padding (pad=1)
    Cp = max(16, _round_up(C, 16))                  # bf16 sublane-packing friendly
    out_bytes = jnp.dtype(out_dtype).itemsize

    # --- VMEM-aware tiling of the flattened spatial (lane) axis --------------
    halo = _round_up(2 * Wp + 2, 128)               # covers the largest tap shift
    vmem_limit = _vmem_limit_bytes()                # ~48 MiB v7x, ~96 MiB v5e/v6e
    budget = int(vmem_limit * 0.8)                  # headroom for Mosaic internals
    fixed = (2 * 2 * Cp * halo                      # halo tile, double-buffered bf16
             + 2 * 2 * Cout * 9 * Cp                # weights (worst-case 2 buffers)
             + 2 * 4 * Cout)                        # bias
    per_lane = (2 * 2 * Cp                          # input tile, double-buffered bf16
                + 2 * out_bytes * Cout              # output tile, double-buffered
                + 2 * 9 * Cp)                       # stacked-operand VMEM scratch
    tp_budget = max(halo, (budget - fixed) // per_lane)
    tp_cap = min(8192, _round_up(H * Wp, halo))     # don't tile far past the image
    mult = max(1, min(tp_budget, tp_cap) // halo)
    tp = halo * mult                                # lane tile, multiple of halo & 128
    pout = _round_up(H * Wp, tp)                    # wide output length (tail trimmed)
    n_pt = pout // tp
    psrc = pout + tp                                # flattened source length
    mult_h = tp // halo                             # halo block stride per tile

    # --- one cheap prep pass: pad + flatten, no transposes, no 9x duplication -
    x16 = x.astype(jnp.bfloat16)
    xpad = jnp.pad(x16, ((0, 0), (0, Cp - C), (1, 1), (1, 1)))     # (N, Cp, Hp, Wp)
    xflat = xpad.reshape(N, Cp, Hp * Wp)
    xflat = jnp.pad(xflat, ((0, 0), (0, 0), (0, psrc - Hp * Wp)))  # zero tail

    # Taps stacked along the contraction dim: K index = (kh*3 + kw)*Cp + c.
    w_t = jnp.transpose(weight, (0, 2, 3, 1))                      # (Cout, 3, 3, Cin)
    w_t = jnp.pad(w_t, ((0, 0), (0, 0), (0, 0), (0, Cp - C)))
    w2d = w_t.reshape(Cout, 9 * Cp).astype(jnp.bfloat16)
    b2 = bias.reshape(Cout, 1).astype(jnp.float32)

    flops = 2 * N * pout * Cout * 9 * Cp
    bytes_accessed = (N * n_pt * Cp * (tp + halo) * 2      # bf16 input tiles + halos
                      + Cout * 9 * Cp * 2 + Cout * 4       # weights + bias (DMA'd once)
                      + N * Cout * pout * out_bytes)       # output

    kernel = functools.partial(_conv3x3_bias_relu_kernel, wp=Wp, cp=Cp)

    # Constant-index-map operands (weights / bias): single-buffer them.
    const_kw = dict(pipeline_mode=pl.Buffered(1)) if single_buffer_consts else {}

    out_wide = pl.pallas_call(
        kernel,
        out_shape=jax.ShapeDtypeStruct((N, Cout, pout), out_dtype),
        grid=(N, n_pt),
        in_specs=[
            pl.BlockSpec((1, Cp, tp), lambda n, j: (n, 0, j)),                   # main
            pl.BlockSpec((1, Cp, halo), lambda n, j: (n, 0, (j + 1) * mult_h)),  # halo
            pl.BlockSpec((Cout, 9 * Cp), lambda n, j: (0, 0), **const_kw),       # weights
            pl.BlockSpec((Cout, 1), lambda n, j: (0, 0), **const_kw),            # bias
        ],
        out_specs=pl.BlockSpec((1, Cout, tp), lambda n, j: (n, 0, j)),
        scratch_shapes=[pltpu.VMEM((9 * Cp, tp), jnp.bfloat16)],
        compiler_params=pltpu.CompilerParams(
            dimension_semantics=("parallel", "parallel"),
            vmem_limit_bytes=vmem_limit),
        cost_estimate=pl.CostEstimate(flops=flops, transcendentals=0,
                                      bytes_accessed=bytes_accessed),
    )(xflat, xflat, w2d, b2)

    # Trim padded-width "junk" columns + tail; contiguous slice + free reshape,
    # no transpose.  Result is NCHW, matching the PyTorch reference.
    out = out_wide[:, :, :H * Wp].reshape(N, Cout, H, Wp)[:, :, :, :W]
    return out


# ----------------------------------------------------------------------------
# Pure-JAX reference (same bf16 input/weight rounding, f32 accumulation).
# ----------------------------------------------------------------------------
def conv3x3_relu_reference(x, weight, bias):
    xr = x.astype(jnp.bfloat16).astype(jnp.float32)
    wr = weight.astype(jnp.bfloat16).astype(jnp.float32)
    N, C, H, W = x.shape
    Cout = weight.shape[0]
    xp = jnp.pad(xr, ((0, 0), (0, 0), (1, 1), (1, 1)))
    out = jnp.zeros((N, Cout, H, W), jnp.float32)
    for kh in range(3):
        for kw in range(3):
            out = out + jnp.einsum(
                "nchw,oc->nohw", xp[:, :, kh:kh + H, kw:kw + W], wr[:, :, kh, kw],
                precision=jax.lax.Precision.HIGHEST)
    return jnp.maximum(out + bias[None, :, None, None], 0.0)


# ----------------------------------------------------------------------------
# Sub-model: Conv3x3 + bias + ReLU (deterministic init, Pallas hot path).
# TODO(synk): model1/model2 are arbitrary user nn.Modules in the original spec;
#             they are represented here by this Conv3x3+ReLU block.
# ----------------------------------------------------------------------------
class ConvReluModel:
    def __init__(self, key, cin, cout):
        kw, kb = jax.random.split(key)
        scale = 1.0 / jnp.sqrt(cin * 9.0)
        self.weight = jax.random.uniform(
            kw, (cout, cin, 3, 3), jnp.float32, -scale, scale)
        self.bias = jax.random.uniform(kb, (cout,), jnp.float32, -scale, scale)
        self._fwd_primary = jax.jit(
            functools.partial(conv3x3_relu_pallas, single_buffer_consts=True))
        self._fwd_fallback = jax.jit(
            functools.partial(conv3x3_relu_pallas, single_buffer_consts=False))
        self._use_fallback = False

    def __call__(self, x):
        if not self._use_fallback:
            try:
                return self._fwd_primary(x, self.weight, self.bias)
            except Exception:
                # pipeline_mode=pl.Buffered(1) not supported by this jax build:
                # retry with default double-buffered weight/bias specs.
                self._use_fallback = True
        return self._fwd_fallback(x, self.weight, self.bias)


# ----------------------------------------------------------------------------
# WholeModel: exact forward semantics of the PyTorch wrapper.
# ----------------------------------------------------------------------------
class WholeModel:
    def __init__(self, model1, model2=None):
        self.model1 = model1
        self.model2 = model2
        self.training = True  # mirrors nn.Module default

    def __call__(self, x, model_nb=1):
        if not self.training:
            return self.model1(x)
        if model_nb == 1:
            return self.model1(x)
        elif model_nb == 2:
            return self.model2(x)
        # model_nb not in {1, 2} while training -> returns None (PyTorch behavior)


if __name__ == "__main__":
    key = jax.random.PRNGKey(0)
    k_in, k_m1, k_m2 = jax.random.split(key, 3)

    N, Cin, H, W = 2, 4, 16, 16
    Cout = 8
    x = jax.random.normal(k_in, (N, Cin, H, W), jnp.float32)

    model1 = ConvReluModel(k_m1, Cin, Cout)
    model2 = ConvReluModel(k_m2, Cin, Cout)
    whole = WholeModel(model1, model2)

    # training mode, model_nb=1 / model_nb=2 / other (None)
    whole.training = True
    y1 = whole(x, model_nb=1)
    y2 = whole(x, model_nb=2)
    y_other = whole(x, model_nb=3)
    # eval mode always routes to model1
    whole.training = False
    y_eval = whole(x, model_nb=2)

    jax.block_until_ready((y1, y2, y_eval))

    assert y1.shape == (N, Cout, H, W)
    assert y2.shape == (N, Cout, H, W)
    assert y_other is None, "model_nb outside {1,2} must return None in training"
    assert jnp.allclose(y_eval.astype(jnp.float32), y1.astype(jnp.float32)), \
        "eval mode must dispatch to model1"

    # numerical check against a pure-JAX conv reference (bf16 output rounding)
    ref1 = conv3x3_relu_reference(x, model1.weight, model1.bias)
    ref2 = conv3x3_relu_reference(x, model2.weight, model2.bias)
    assert jnp.allclose(y1.astype(jnp.float32), ref1, atol=2e-2, rtol=2e-2), \
        "model1 conv mismatch"
    assert jnp.allclose(y2.astype(jnp.float32), ref2, atol=2e-2, rtol=2e-2), \
        "model2 conv mismatch"

    print("KERNEL_OK")
</pallas_src>

<mosaic_0001>
module attributes {stable_mosaic.version = 11 : i64} {
  func.func @_conv3x3_bias_relu_kernel(%arg0: i32, %arg1: i32, %arg2: memref<1x16x384xbf16, #tpu.memory_space<vmem>>, %arg3: memref<1x16x128xbf16, #tpu.memory_space<vmem>>, %arg4: memref<8x144xbf16, #tpu.memory_space<vmem>>, %arg5: memref<8x1xf32, #tpu.memory_space<vmem>>, %arg6: memref<1x8x384xbf16, #tpu.memory_space<vmem>>, %arg7: memref<144x384xbf16, #tpu.memory_space<vmem>>) attributes {dimension_semantics = [#tpu.dimension_semantics<parallel>, #tpu.dimension_semantics<parallel>], iteration_bounds = array<i64: 2, 1>, scalar_prefetch = 0 : i64, scratch_operands = 1 : i64, tpu.core_type = #tpu.core_type<tc>, window_params = [{transform_indices = @transform_0, window_bounds = array<i64: 1, 16, 384>}, {transform_indices = @transform_1, window_bounds = array<i64: 1, 16, 128>}, {pipeline_mode = #tpu.pipeline_mode<synchronous>, transform_indices = @transform_2, window_bounds = array<i64: 8, 144>}, {pipeline_mode = #tpu.pipeline_mode<synchronous>, transform_indices = @transform_3, window_bounds = array<i64: 8, 1>}, {transform_indices = @transform_4, window_bounds = array<i64: 1, 8, 384>}]} {
    %c0 = arith.constant 0 : index
    %c0_0 = arith.constant 0 : index
    %c0_1 = arith.constant 0 : index
    %0 = vector.load %arg2[%c0, %c0_0, %c0_1] : memref<1x16x384xbf16, #tpu.memory_space<vmem>>, vector<1x16x384xbf16>
    %1 = vector.shape_cast %0 : vector<1x16x384xbf16> to vector<16x384xbf16>
    %c0_2 = arith.constant 0 : index
    %c0_3 = arith.constant 0 : index
    %c0_4 = arith.constant 0 : index
    %2 = vector.load %arg3[%c0_2, %c0_3, %c0_4] : memref<1x16x128xbf16, #tpu.memory_space<vmem>>, vector<1x16x128xbf16>
    %3 = vector.shape_cast %2 : vector<1x16x128xbf16> to vector<16x128xbf16>
    %c0_5 = arith.constant 0 : index
    %c0_6 = arith.constant 0 : index
    %4 = vector.load %arg7[%c0_5, %c0_6] : memref<144x384xbf16, #tpu.memory_space<vmem>>, vector<16x384xbf16>
    tpu.vector_store %arg7[%c0_5, %c0_6], %1 {strides = array<i32>} : memref<144x384xbf16, #tpu.memory_space<vmem>>, vector<16x384xbf16>,
    %5 = vector.extract_strided_slice %1 {offsets = [0, 1], sizes = [16, 383], strides = [1, 1]} : vector<16x384xbf16> to vector<16x383xbf16>
    %c16 = arith.constant 16 : index
    %c0_7 = arith.constant 0 : index
    %6 = vector.load %arg7[%c16, %c0_7] : memref<144x384xbf16, #tpu.memory_space<vmem>>, vector<16x383xbf16>
    tpu.vector_store %arg7[%c16, %c0_7], %5 {strides = array<i32>} : memref<144x384xbf16, #tpu.memory_space<vmem>>, vector<16x383xbf16>,
    %7 = vector.extract_strided_slice %3 {offsets = [0, 0], sizes = [16, 1], strides = [1, 1]} : vector<16x128xbf16> to vector<16x1xbf16>
    %c16_8 = arith.constant 16 : index
    %c383 = arith.constant 383 : index
    %8 = vector.load %arg7[%c16_8, %c383] : memref<144x384xbf16, #tpu.memory_space<vmem>>, vector<16x1xbf16>
    tpu.vector_store %arg7[%c16_8, %c383], %7 {strides = array<i32>} : memref<144x384xbf16, #tpu.memory_space<vmem>>, vector<16x1xbf16>,
    %9 = vector.extract_strided_slice %1 {offsets = [0, 2], sizes = [16, 382], strides = [1, 1]} : vector<16x384xbf16> to vector<16x382xbf16>
    %c32 = arith.constant 32 : index
    %c0_9 = arith.constant 0 : index
    %10 = vector.load %arg7[%c32, %c0_9] : memref<144x384xbf16, #tpu.memory_space<vmem>>, vector<16x382xbf16>
    tpu.vector_store %arg7[%c32, %c0_9], %9 {strides = array<i32>} : memref<144x384xbf16, #tpu.memory_space<vmem>>, vector<16x382xbf16>,
    %11 = vector.extract_strided_slice %3 {offsets = [0, 0], sizes = [16, 2], strides = [1, 1]} : vector<16x128xbf16> to vector<16x2xbf16>
    %c32_10 = arith.constant 32 : index
    %c382 = arith.constant 382 : index
    %12 = vector.load %arg7[%c32_10, %c382] : memref<144x384xbf16, #tpu.memory_space<vmem>>, vector<16x2xbf16>
    tpu.vector_store %arg7[%c32_10, %c382], %11 {strides = array<i32>} : memref<144x384xbf16, #tpu.memory_space<vmem>>, vector<16x2xbf16>,
    %13 = vector.extract_strided_slice %1 {offsets = [0, 18], sizes = [16, 366], strides = [1, 1]} : vector<16x384xbf16> to vector<16x366xbf16>
    %c48 = arith.constant 48 : index
    %c0_11 = arith.constant 0 : index
    %14 = vector.load %arg7[%c48, %c0_11] : memref<144x384xbf16, #tpu.memory_space<vmem>>, vector<16x366xbf16>
    tpu.vector_store %arg7[%c48, %c0_11], %13 {strides = array<i32>} : memref<144x384xbf16, #tpu.memory_space<vmem>>, vector<16x366xbf16>,
    %15 = vector.extract_strided_slice %3 {offsets = [0, 0], sizes = [16, 18], strides = [1, 1]} : vector<16x128xbf16> to vector<16x18xbf16>
    %c48_12 = arith.constant 48 : index
    %c366 = arith.constant 366 : index
    %16 = vector.load %arg7[%c48_12, %c366] : memref<144x384xbf16, #tpu.memory_space<vmem>>, vector<16x18xbf16>
    tpu.vector_store %arg7[%c48_12, %c366], %15 {strides = array<i32>} : memref<144x384xbf16, #tpu.memory_space<vmem>>, vector<16x18xbf16>,
    %17 = vector.extract_strided_slice %1 {offsets = [0, 19], sizes = [16, 365], strides = [1, 1]} : vector<16x384xbf16> to vector<16x365xbf16>
    %c64 = arith.constant 64 : index
    %c0_13 = arith.constant 0 : index
    %18 = vector.load %arg7[%c64, %c0_13] : memref<144x384xbf16, #tpu.memory_space<vmem>>, vector<16x365xbf16>
    tpu.vector_store %arg7[%c64, %c0_13], %17 {strides = array<i32>} : memref<144x384xbf16, #tpu.memory_space<vmem>>, vector<16x365xbf16>,
    %19 = vector.extract_strided_slice %3 {offsets = [0, 0], sizes = [16, 19], strides = [1, 1]} : vector<16x128xbf16> to vector<16x19xbf16>
    %c64_14 = arith.constant 64 : index
    %c365 = arith.constant 365 : index
    %20 = vector.load %arg7[%c64_14, %c365] : memref<144x384xbf16, #tpu.memory_space<vmem>>, vector<16x19xbf16>
    tpu.vector_store %arg7[%c64_14, %c365], %19 {strides = array<i32>} : memref<144x384xbf16, #tpu.memory_space<vmem>>, vector<16x19xbf16>,
    %21 = vector.extract_strided_slice %1 {offsets = [0, 20], sizes = [16, 364], strides = [1, 1]} : vector<16x384xbf16> to vector<16x364xbf16>
    %c80 = arith.constant 80 : index
    %c0_15 = arith.constant 0 : index
    %22 = vector.load %arg7[%c80, %c0_15] : memref<144x384xbf16, #tpu.memory_space<vmem>>, vector<16x364xbf16>
    tpu.vector_store %arg7[%c80, %c0_15], %21 {strides = array<i32>} : memref<144x384xbf16, #tpu.memory_space<vmem>>, vector<16x364xbf16>,
    %23 = vector.extract_strided_slice %3 {offsets = [0, 0], sizes = [16, 20], strides = [1, 1]} : vector<16x128xbf16> to vector<16x20xbf16>
    %c80_16 = arith.constant 80 : index
    %c364 = arith.constant 364 : index
    %24 = vector.load %arg7[%c80_16, %c364] : memref<144x384xbf16, #tpu.memory_space<vmem>>, vector<16x20xbf16>
    tpu.vector_store %arg7[%c80_16, %c364], %23 {strides = array<i32>} : memref<144x384xbf16, #tpu.memory_space<vmem>>, vector<16x20xbf16>,
    %25 = vector.extract_strided_slice %1 {offsets = [0, 36], sizes = [16, 348], strides = [1, 1]} : vector<16x384xbf16> to vector<16x348xbf16>
    %c96 = arith.constant 96 : index
    %c0_17 = arith.constant 0 : index
    %26 = vector.load %arg7[%c96, %c0_17] : memref<144x384xbf16, #tpu.memory_space<vmem>>, vector<16x348xbf16>
    tpu.vector_store %arg7[%c96, %c0_17], %25 {strides = array<i32>} : memref<144x384xbf16, #tpu.memory_space<vmem>>, vector<16x348xbf16>,
    %27 = vector.extract_strided_slice %3 {offsets = [0, 0], sizes = [16, 36], strides = [1, 1]} : vector<16x128xbf16> to vector<16x36xbf16>
    %c96_18 = arith.constant 96 : index
    %c348 = arith.constant 348 : index
    %28 = vector.load %arg7[%c96_18, %c348] : memref<144x384xbf16, #tpu.memory_space<vmem>>, vector<16x36xbf16>
    tpu.vector_store %arg7[%c96_18, %c348], %27 {strides = array<i32>} : memref<144x384xbf16, #tpu.memory_space<vmem>>, vector<16x36xbf16>,
    %29 = vector.extract_strided_slice %1 {offsets = [0, 37], sizes = [16, 347], strides = [1, 1]} : vector<16x384xbf16> to vector<16x347xbf16>
    %c112 = arith.constant 112 : index
    %c0_19 = arith.constant 0 : index
    %30 = vector.load %arg7[%c112, %c0_19] : memref<144x384xbf16, #tpu.memory_space<vmem>>, vector<16x347xbf16>
    tpu.vector_store %arg7[%c112, %c0_19], %29 {strides = array<i32>} : memref<144x384xbf16, #tpu.memory_space<vmem>>, vector<16x347xbf16>,
    %31 = vector.extract_strided_slice %3 {offsets = [0, 0], sizes = [16, 37], strides = [1, 1]} : vector<16x128xbf16> to vector<16x37xbf16>
    %c112_20 = arith.constant 112 : index
    %c347 = arith.constant 347 : index
    %32 = vector.load %arg7[%c112_20, %c347] : memref<144x384xbf16, #tpu.memory_space<vmem>>, vector<16x37xbf16>
    tpu.vector_store %arg7[%c112_20, %c347], %31 {strides = array<i32>} : memref<144x384xbf16, #tpu.memory_space<vmem>>, vector<16x37xbf16>,
    %33 = vector.extract_strided_slice %1 {offsets = [0, 38], sizes = [16, 346], strides = [1, 1]} : vector<16x384xbf16> to vector<16x346xbf16>
    %c128 = arith.constant 128 : index
    %c0_21 = arith.constant 0 : index
    %34 = vector.load %arg7[%c128, %c0_21] : memref<144x384xbf16, #tpu.memory_space<vmem>>, vector<16x346xbf16>
    tpu.vector_store %arg7[%c128, %c0_21], %33 {strides = array<i32>} : memref<144x384xbf16, #tpu.memory_space<vmem>>, vector<16x346xbf16>,
    %35 = vector.extract_strided_slice %3 {offsets = [0, 0], sizes = [16, 38], strides = [1, 1]} : vector<16x128xbf16> to vector<16x38xbf16>
    %c128_22 = arith.constant 128 : index
    %c346 = arith.constant 346 : index
    %36 = vector.load %arg7[%c128_22, %c346] : memref<144x384xbf16, #tpu.memory_space<vmem>>, vector<16x38xbf16>
    tpu.vector_store %arg7[%c128_22, %c346], %35 {strides = array<i32>} : memref<144x384xbf16, #tpu.memory_space<vmem>>, vector<16x38xbf16>,
    %c0_23 = arith.constant 0 : index
    %c0_24 = arith.constant 0 : index
    %37 = vector.load %arg4[%c0_23, %c0_24] : memref<8x144xbf16, #tpu.memory_space<vmem>>, vector<8x144xbf16>
    %c0_25 = arith.constant 0 : index
    %c0_26 = arith.constant 0 : index
    %38 = vector.load %arg7[%c0_25, %c0_26] : memref<144x384xbf16, #tpu.memory_space<vmem>>, vector<144x384xbf16>
    %cst = arith.constant dense<0.000000e+00> : vector<8x384xf32>
    %39 = tpu.matmul %37, %38, %cst {dimension_numbers = #tpu.dot_dimension_numbers<[1], [0], [0], [1], [0, 0, 1, 1], [], []>} : vector<8x144xbf16>, vector<144x384xbf16>, vector<8x384xf32> -> vector<8x384xf32>
    %c0_27 = arith.constant 0 : index
    %c0_28 = arith.constant 0 : index
    %40 = vector.load %arg5[%c0_27, %c0_28] : memref<8x1xf32, #tpu.memory_space<vmem>>, vector<8x1xf32>
    %41 = vector.broadcast %40 : vector<8x1xf32> to vector<8x384xf32>
    %42 = arith.addf %39, %41 : vector<8x384xf32>
    %cst_29 = arith.constant 0.000000e+00 : f32
    %43 = vector.broadcast %cst_29 : f32 to vector<8x384xf32>
    %44 = arith.maximumf %42, %43 : vector<8x384xf32>
    %45 = arith.truncf %44 : vector<8x384xf32> to vector<8x384xbf16>
    %c0_30 = arith.constant 0 : index
    %c0_31 = arith.constant 0 : index
    %c0_32 = arith.constant 0 : index
    %46 = vector.load %arg6[%c0_30, %c0_31, %c0_32] : memref<1x8x384xbf16, #tpu.memory_space<vmem>>, vector<1x8x384xbf16>
    %47 = vector.shape_cast %46 : vector<1x8x384xbf16> to vector<8x384xbf16>
    %48 = vector.shape_cast %45 : vector<8x384xbf16> to vector<1x8x384xbf16>
    tpu.vector_store %arg6[%c0_30, %c0_31, %c0_32], %48 {strides = array<i32>} : memref<1x8x384xbf16, #tpu.memory_space<vmem>>, vector<1x8x384xbf16>,
    return
  }
  func.func @transform_0(%arg0: i32, %arg1: i32) -> (i32, i32, i32) {
    %c0_i32 = arith.constant 0 : i32
    %c0_i32_0 = arith.constant 0 : i32
    return %arg0, %c0_i32, %arg1 : i32, i32, i32
  }
  func.func @transform_1(%arg0: i32, %arg1: i32) -> (i32, i32, i32) {
    %c1_i32 = arith.constant 1 : i32
    %0 = arith.addi %arg1, %c1_i32 : i32
    %c3_i32 = arith.constant 3 : i32
    %1 = arith.muli %0, %c3_i32 : i32
    %c0_i32 = arith.constant 0 : i32
    %c0_i32_0 = arith.constant 0 : i32
    return %arg0, %c0_i32, %1 : i32, i32, i32
  }
  func.func @transform_2(%arg0: i32, %arg1: i32) -> (i32, i32) {
    %c0_i32 = arith.constant 0 : i32
    %c0_i32_0 = arith.constant 0 : i32
    %c0_i32_1 = arith.constant 0 : i32
    return %c0_i32, %c0_i32_0 : i32, i32
  }
  func.func @transform_3(%arg0: i32, %arg1: i32) -> (i32, i32) {
    %c0_i32 = arith.constant 0 : i32
    %c0_i32_0 = arith.constant 0 : i32
    %c0_i32_1 = arith.constant 0 : i32
    return %c0_i32, %c0_i32_0 : i32, i32
  }
  func.func @transform_4(%arg0: i32, %arg1: i32) -> (i32, i32, i32) {
    %c0_i32 = arith.constant 0 : i32
    %c0_i32_0 = arith.constant 0 : i32
    return %arg0, %c0_i32, %arg1 : i32, i32, i32
  }
}

module attributes {stable_mosaic.version = 11 : i64} {
  func.func @_conv3x3_bias_relu_kernel(%arg0: i32, %arg1: i32, %arg2: memref<1x16x384xbf16, #tpu.memory_space<vmem>>, %arg3: memref<1x16x128xbf16, #tpu.memory_space<vmem>>, %arg4: memref<8x144xbf16, #tpu.memory_space<vmem>>, %arg5: memref<8x1xf32, #tpu.memory_space<vmem>>, %arg6: memref<1x8x384xbf16, #tpu.memory_space<vmem>>, %arg7: memref<144x384xbf16, #tpu.memory_space<vmem>>) attributes {dimension_semantics = [#tpu.dimension_semantics<parallel>, #tpu.dimension_semantics<parallel>], iteration_bounds = array<i64: 2, 1>, scalar_prefetch = 0 : i64, scratch_operands = 1 : i64, tpu.core_type = #tpu.core_type<tc>, window_params = [{transform_indices = @transform_0, window_bounds = array<i64: 1, 16, 384>}, {transform_indices = @transform_1, window_bounds = array<i64: 1, 16, 128>}, {pipeline_mode = #tpu.pipeline_mode<synchronous>, transform_indices = @transform_2, window_bounds = array<i64: 8, 144>}, {pipeline_mode = #tpu.pipeline_mode<synchronous>, transform_indices = @transform_3, window_bounds = array<i64: 8, 1>}, {transform_indices = @transform_4, window_bounds = array<i64: 1, 8, 384>}]} {
    %c0 = arith.constant 0 : index
    %c0_0 = arith.constant 0 : index
    %c0_1 = arith.constant 0 : index
    %0 = vector.load %arg2[%c0, %c0_0, %c0_1] : memref<1x16x384xbf16, #tpu.memory_space<vmem>>, vector<1x16x384xbf16>
    %1 = vector.shape_cast %0 : vector<1x16x384xbf16> to vector<16x384xbf16>
    %c0_2 = arith.constant 0 : index
    %c0_3 = arith.constant 0 : index
    %c0_4 = arith.constant 0 : index
    %2 = vector.load %arg3[%c0_2, %c0_3, %c0_4] : memref<1x16x128xbf16, #tpu.memory_space<vmem>>, vector<1x16x128xbf16>
    %3 = vector.shape_cast %2 : vector<1x16x128xbf16> to vector<16x128xbf16>
    %c0_5 = arith.constant 0 : index
    %c0_6 = arith.constant 0 : index
    %4 = vector.load %arg7[%c0_5, %c0_6] : memref<144x384xbf16, #tpu.memory_space<vmem>>, vector<16x384xbf16>
    tpu.vector_store %arg7[%c0_5, %c0_6], %1 {strides = array<i32>} : memref<144x384xbf16, #tpu.memory_space<vmem>>, vector<16x384xbf16>,
    %5 = vector.extract_strided_slice %1 {offsets = [0, 1], sizes = [16, 383], strides = [1, 1]} : vector<16x384xbf16> to vector<16x383xbf16>
    %c16 = arith.constant 16 : index
    %c0_7 = arith.constant 0 : index
    %6 = vector.load %arg7[%c16, %c0_7] : memref<144x384xbf16, #tpu.memory_space<vmem>>, vector<16x383xbf16>
    tpu.vector_store %arg7[%c16, %c0_7], %5 {strides = array<i32>} : memref<144x384xbf16, #tpu.memory_space<vmem>>, vector<16x383xbf16>,
    %7 = vector.extract_strided_slice %3 {offsets = [0, 0], sizes = [16, 1], strides = [1, 1]} : vector<16x128xbf16> to vector<16x1xbf16>
    %c16_8 = arith.constant 16 : index
    %c383 = arith.constant 383 : index
    %8 = vector.load %arg7[%c16_8, %c383] : memref<144x384xbf16, #tpu.memory_space<vmem>>, vector<16x1xbf16>
    tpu.vector_store %arg7[%c16_8, %c383], %7 {strides = array<i32>} : memref<144x384xbf16, #tpu.memory_space<vmem>>, vector<16x1xbf16>,
    %9 = vector.extract_strided_slice %1 {offsets = [0, 2], sizes = [16, 382], strides = [1, 1]} : vector<16x384xbf16> to vector<16x382xbf16>
    %c32 = arith.constant 32 : index
    %c0_9 = arith.constant 0 : index
    %10 = vector.load %arg7[%c32, %c0_9] : memref<144x384xbf16, #tpu.memory_space<vmem>>, vector<16x382xbf16>
    tpu.vector_store %arg7[%c32, %c0_9], %9 {strides = array<i32>} : memref<144x384xbf16, #tpu.memory_space<vmem>>, vector<16x382xbf16>,
    %11 = vector.extract_strided_slice %3 {offsets = [0, 0], sizes = [16, 2], strides = [1, 1]} : vector<16x128xbf16> to vector<16x2xbf16>
    %c32_10 = arith.constant 32 : index
    %c382 = arith.constant 382 : index
    %12 = vector.load %arg7[%c32_10, %c382] : memref<144x384xbf16, #tpu.memory_space<vmem>>, vector<16x2xbf16>
    tpu.vector_store %arg7[%c32_10, %c382], %11 {strides = array<i32>} : memref<144x384xbf16, #tpu.memory_space<vmem>>, vector<16x2xbf16>,
    %13 = vector.extract_strided_slice %1 {offsets = [0, 18], sizes = [16, 366], strides = [1, 1]} : vector<16x384xbf16> to vector<16x366xbf16>
    %c48 = arith.constant 48 : index
    %c0_11 = arith.constant 0 : index
    %14 = vector.load %arg7[%c48, %c0_11] : memref<144x384xbf16, #tpu.memory_space<vmem>>, vector<16x366xbf16>
    tpu.vector_store %arg7[%c48, %c0_11], %13 {strides = array<i32>} : memref<144x384xbf16, #tpu.memory_space<vmem>>, vector<16x366xbf16>,
    %15 = vector.extract_strided_slice %3 {offsets = [0, 0], sizes = [16, 18], strides = [1, 1]} : vector<16x128xbf16> to vector<16x18xbf16>
    %c48_12 = arith.constant 48 : index
    %c366 = arith.constant 366 : index
    %16 = vector.load %arg7[%c48_12, %c366] : memref<144x384xbf16, #tpu.memory_space<vmem>>, vector<16x18xbf16>
    tpu.vector_store %arg7[%c48_12, %c366], %15 {strides = array<i32>} : memref<144x384xbf16, #tpu.memory_space<vmem>>, vector<16x18xbf16>,
    %17 = vector.extract_strided_slice %1 {offsets = [0, 19], sizes = [16, 365], strides = [1, 1]} : vector<16x384xbf16> to vector<16x365xbf16>
    %c64 = arith.constant 64 : index
    %c0_13 = arith.constant 0 : index
    %18 = vector.load %arg7[%c64, %c0_13] : memref<144x384xbf16, #tpu.memory_space<vmem>>, vector<16x365xbf16>
    tpu.vector_store %arg7[%c64, %c0_13], %17 {strides = array<i32>} : memref<144x384xbf16, #tpu.memory_space<vmem>>, vector<16x365xbf16>,
    %19 = vector.extract_strided_slice %3 {offsets = [0, 0], sizes = [16, 19], strides = [1, 1]} : vector<16x128xbf16> to vector<16x19xbf16>
    %c64_14 = arith.constant 64 : index
    %c365 = arith.constant 365 : index
    %20 = vector.load %arg7[%c64_14, %c365] : memref<144x384xbf16, #tpu.memory_space<vmem>>, vector<16x19xbf16>
    tpu.vector_store %arg7[%c64_14, %c365], %19 {strides = array<i32>} : memref<144x384xbf16, #tpu.memory_space<vmem>>, vector<16x19xbf16>,
    %21 = vector.extract_strided_slice %1 {offsets = [0, 20], sizes = [16, 364], strides = [1, 1]} : vector<16x384xbf16> to vector<16x364xbf16>
    %c80 = arith.constant 80 : index
    %c0_15 = arith.constant 0 : index
    %22 = vector.load %arg7[%c80, %c0_15] : memref<144x384xbf16, #tpu.memory_space<vmem>>, vector<16x364xbf16>
    tpu.vector_store %arg7[%c80, %c0_15], %21 {strides = array<i32>} : memref<144x384xbf16, #tpu.memory_space<vmem>>, vector<16x364xbf16>,
    %23 = vector.extract_strided_slice %3 {offsets = [0, 0], sizes = [16, 20], strides = [1, 1]} : vector<16x128xbf16> to vector<16x20xbf16>
    %c80_16 = arith.constant 80 : index
    %c364 = arith.constant 364 : index
    %24 = vector.load %arg7[%c80_16, %c364] : memref<144x384xbf16, #tpu.memory_space<vmem>>, vector<16x20xbf16>
    tpu.vector_store %arg7[%c80_16, %c364], %23 {strides = array<i32>} : memref<144x384xbf16, #tpu.memory_space<vmem>>, vector<16x20xbf16>,
    %25 = vector.extract_strided_slice %1 {offsets = [0, 36], sizes = [16, 348], strides = [1, 1]} : vector<16x384xbf16> to vector<16x348xbf16>
    %c96 = arith.constant 96 : index
    %c0_17 = arith.constant 0 : index
    %26 = vector.load %arg7[%c96, %c0_17] : memref<144x384xbf16, #tpu.memory_space<vmem>>, vector<16x348xbf16>
    tpu.vector_store %arg7[%c96, %c0_17], %25 {strides = array<i32>} : memref<144x384xbf16, #tpu.memory_space<vmem>>, vector<16x348xbf16>,
    %27 = vector.extract_strided_slice %3 {offsets = [0, 0], sizes = [16, 36], strides = [1, 1]} : vector<16x128xbf16> to vector<16x36xbf16>
    %c96_18 = arith.constant 96 : index
    %c348 = arith.constant 348 : index
    %28 = vector.load %arg7[%c96_18, %c348] : memref<144x384xbf16, #tpu.memory_space<vmem>>, vector<16x36xbf16>
    tpu.vector_store %arg7[%c96_18, %c348], %27 {strides = array<i32>} : memref<144x384xbf16, #tpu.memory_space<vmem>>, vector<16x36xbf16>,
    %29 = vector.extract_strided_slice %1 {offsets = [0, 37], sizes = [16, 347], strides = [1, 1]} : vector<16x384xbf16> to vector<16x347xbf16>
    %c112 = arith.constant 112 : index
    %c0_19 = arith.constant 0 : index
    %30 = vector.load %arg7[%c112, %c0_19] : memref<144x384xbf16, #tpu.memory_space<vmem>>, vector<16x347xbf16>
    tpu.vector_store %arg7[%c112, %c0_19], %29 {strides = array<i32>} : memref<144x384xbf16, #tpu.memory_space<vmem>>, vector<16x347xbf16>,
    %31 = vector.extract_strided_slice %3 {offsets = [0, 0], sizes = [16, 37], strides = [1, 1]} : vector<16x128xbf16> to vector<16x37xbf16>
    %c112_20 = arith.constant 112 : index
    %c347 = arith.constant 347 : index
    %32 = vector.load %arg7[%c112_20, %c347] : memref<144x384xbf16, #tpu.memory_space<vmem>>, vector<16x37xbf16>
    tpu.vector_store %arg7[%c112_20, %c347], %31 {strides = array<i32>} : memref<144x384xbf16, #tpu.memory_space<vmem>>, vector<16x37xbf16>,
    %33 = vector.extract_strided_slice %1 {offsets = [0, 38], sizes = [16, 346], strides = [1, 1]} : vector<16x384xbf16> to vector<16x346xbf16>
    %c128 = arith.constant 128 : index
    %c0_21 = arith.constant 0 : index
    %34 = vector.load %arg7[%c128, %c0_21] : memref<144x384xbf16, #tpu.memory_space<vmem>>, vector<16x346xbf16>
    tpu.vector_store %arg7[%c128, %c0_21], %33 {strides = array<i32>} : memref<144x384xbf16, #tpu.memory_space<vmem>>, vector<16x346xbf16>,
    %35 = vector.extract_strided_slice %3 {offsets = [0, 0], sizes = [16, 38], strides = [1, 1]} : vector<16x128xbf16> to vector<16x38xbf16>
    %c128_22 = arith.constant 128 : index
    %c346 = arith.constant 346 : index
    %36 = vector.load %arg7[%c128_22, %c346] : memref<144x384xbf16, #tpu.memory_space<vmem>>, vector<16x38xbf16>
    tpu.vector_store %arg7[%c128_22, %c346], %35 {strides = array<i32>} : memref<144x384xbf16, #tpu.memory_space<vmem>>, vector<16x38xbf16>,
    %c0_23 = arith.constant 0 : index
    %c0_24 = arith.constant 0 : index
    %37 = vector.load %arg4[%c0_23, %c0_24] : memref<8x144xbf16, #tpu.memory_space<vmem>>, vector<8x144xbf16>
    %c0_25 = arith.constant 0 : index
    %c0_26 = arith.constant 0 : index
    %38 = vector.load %arg7[%c0_25, %c0_26] : memref<144x384xbf16, #tpu.memory_space<vmem>>, vector<144x384xbf16>
    %cst = arith.constant dense<0.000000e+00> : vector<8x384xf32>
    %39 = tpu.matmul %37, %38, %cst {dimension_numbers = #tpu.dot_dimension_numbers<[1], [0], [0], [1], [0, 0, 1, 1], [], []>} : vector<8x144xbf16>, vector<144x384xbf16>, vector<8x384xf32> -> vector<8x384xf32>
    %c0_27 = arith.constant 0 : index
    %c0_28 = arith.constant 0 : index
    %40 = vector.load %arg5[%c0_27, %c0_28] : memref<8x1xf32, #tpu.memory_space<vmem>>, vector<8x1xf32>
    %41 = vector.broadcast %40 : vector<8x1xf32> to vector<8x384xf32>
    %42 = arith.addf %39, %41 : vector<8x384xf32>
    %cst_29 = arith.constant 0.000000e+00 : f32
    %43 = vector.broadcast %cst_29 : f32 to vector<8x384xf32>
    %44 = arith.maximumf %42, %43 : vector<8x384xf32>
    %45 = arith.truncf %44 : vector<8x384xf32> to vector<8x384xbf16>
    %c0_30 = arith.constant 0 : index
    %c0_31 = arith.constant 0 : index
    %c0_32 = arith.constant 0 : index
    %46 = vector.load %arg6[%c0_30, %c0_31, %c0_32] : memref<1x8x384xbf16, #tpu.memory_space<vmem>>, vector<1x8x384xbf16>
    %47 = vector.shape_cast %46 : vector<1x8x384xbf16> to vector<8x384xbf16>
    %48 = vector.shape_cast %45 : vector<8x384xbf16> to vector<1x8x384xbf16>
    tpu.vector_store %arg6[%c0_30, %c0_31, %c0_32], %48 {strides = array<i32>} : memref<1x8x384xbf16, #tpu.memory_space<vmem>>, vector<1x8x384xbf16>,
    return
  }
  func.func @transform_0(%arg0: i32, %arg1: i32) -> (i32, i32, i32) {
    %c0_i32 = arith.constant 0 : i32
    %c0_i32_0 = arith.constant 0 : i32
    return %arg0, %c0_i32, %arg1 : i32, i32, i32
  }
  func.func @transform_1(%arg0: i32, %arg1: i32) -> (i32, i32, i32) {
    %c1_i32 = arith.constant 1 : i32
    %0 = arith.addi %arg1, %c1_i32 : i32
    %c3_i32 = arith.constant 3 : i32
    %1 = arith.muli %0, %c3_i32 : i32
    %c0_i32 = arith.constant 0 : i32
    %c0_i32_0 = arith.constant 0 : i32
    return %arg0, %c0_i32, %1 : i32, i32, i32
  }
  func.func @transform_2(%arg0: i32, %arg1: i32) -> (i32, i32) {
    %c0_i32 = arith.constant 0 : i32
    %c0_i32_0 = arith.constant 0 : i32
    %c0_i32_1 = arith.constant 0 : i32
    return %c0_i32, %c0_i32_0 : i32, i32
  }
  func.func @transform_3(%arg0: i32, %arg1: i32) -> (i32, i32) {
    %c0_i32 = arith.constant 0 : i32
    %c0_i32_0 = arith.constant 0 : i32
    %c0_i32_1 = arith.constant 0 : i32
    return %c0_i32, %c0_i32_0 : i32, i32
  }
  func.func @transform_4(%arg0: i32, %arg1: i32) -> (i32, i32, i32) {
    %c0_i32 = arith.constant 0 : i32
    %c0_i32_0 = arith.constant 0 : i32
    return %arg0, %c0_i32, %arg1 : i32, i32, i32
  }
}

</mosaic_0001>

<llo_original>
// kernel: conv3x3_relu_pallas.1
$region0: #{conv3x3_relu_pallas.1}
  #allocation0 [shape = 'u32[]', space=smem, size = 0x4, offset = 0x4, fixed_abs, tag = 'smem constant byte address 0x4 - core index']
  #allocation1 [shape = 'u32[72,128]{1,0:T(1,128)}', space=vmem, size = 0x9000, scoped, tag = 'internal scratch']
  #allocation2 [shape = 'bf16[144,384]{1,0:T(8,128)(2,1)}', space=vmem, size = 0x1b000, scoped, tag = 'scratch operand']
  %s0 = inlined_call_operand.vmem [shape: bf16[2,16,768], index: 0, kind: input, shape index: {}, may-alias: {0,1}]
  %s1 = inlined_call_operand.vmem [shape: bf16[2,16,768], index: 1, kind: input, shape index: {}, may-alias: {0,1}]
  %s2 = inlined_call_operand.vmem [shape: bf16[8,144], index: 2, kind: input, shape index: {}]
  %s3 = inlined_call_operand.vmem [shape: f32[8,1], index: 3, kind: input, shape index: {}]
  %s4 = inlined_call_operand.vmem [shape: bf16[2,8,384], index: 4, kind: output, shape index: {}]
  %s5 = sld [smem:[#allocation0]]
  $region116: #{conv3x3_relu_pallas.1} parent=0
    _
  %s7 = ssub.s32 1, %s5
  %s8 = scalar_select 0, %s7, %s5
  $region1: #{conv3x3_relu_pallas.1} parent=0
    #allocation3 [shape = 'u8[24576]{0}', space=vmem, size = 0x6000, scoped, tag = 'input window, operand 0']
    #allocation4 [shape = 'u8[8192]{0}', space=vmem, size = 0x2000, scoped, tag = 'input window, operand 1']
    loop: start=0, step=1, limit=4
    $region2: #{conv3x3_relu_pallas.1} parent=1 // loop_pre_header
      _
    $region3: #{conv3x3_relu_pallas.1} parent=1 // loop_header
      %s10 = sphi 0, %s14
      %p11 = scmp.ge.s32.totalorder %s10, 4
      %s17 = sphi 0, %s29
      %s18 = sphi 0, %s25
      %s19 = sphi 0, %s17
      %s20 = sphi 0, %s18
      %s21 = sphi 0, %s19
      %s22 = sphi 0, %s20
      %s34 = sphi 0, %s36
      %s37 = sphi 0, %s34
      %s38 = sphi 0, %s37
      %s54 = sphi 0, %s38
      %s66 = sphi 0, %s68
      %s69 = sphi 0, %s66
      %s70 = sphi 0, %s69
      %s86 = sphi 0, %s70
      %s90 = sphi 0, %s90
      %s92 = sphi 0, %s90
      %s93 = sphi 0, %s92
      %s107 = sphi 0, %s93
      %s111 = sphi 0, %s111
      %s113 = sphi 0, %s111
      %s114 = sphi 0, %s113
      %s128 = sphi 0, %s114
      %s136 = sphi 0, %s138
      %s139 = sphi 0, %s136
      %s140 = sphi 0, %s139
      %s156 = sphi 0, %s140
    $region4: #{conv3x3_relu_pallas.1} parent=1 // loop_header_branch
      %13 = sbr.rel (%p11) target = $region8
    $region5: #{conv3x3_relu_pallas.1} parent=1 // loop_body
      %s15 = ssub.s32 %s10, 1
      %s16 = ssub.s32 %s10, 2
      %s23 = sadd.s32 1, %s18
      %p24 = scmp.ge.s32.totalorder %s23, 1
      %s25 = scalar_select %p24, 0, %s23
      %s26 = sadd.s32 1, %s17
      %s27 = scalar_select %p24, %s26, %s17
      %p28 = scmp.ge.s32.totalorder %s27, 2
      %s29 = scalar_select %p28, 0, %s27
      %s30 = ssub.s32 %s17, %s29
      %s31 = ssub.s32 %s18, %s25
      %s32 = sor.u32 %s30, %s31
      %p33 = scmp.eq.s32.totalorder %s32, 0
      %s35 = sadd.s32 %s34, 1
      %s36 = scalar_select %p33, %s34, %s35
      %p39 = pneg %p33
      %p40 = scmp.eq.s32.totalorder %s10, 1
      %p41 = por %p39, %p40
      %p42 = scmp.ne.s32.totalorder %s34, %s37
      %p43 = scmp.eq.s32.totalorder %s10, 0
      %p44 = por %p42, %p43
      %p45 = scmp.ne.s32.totalorder %s34, %s37
      %p46 = scmp.eq.s32.totalorder %s15, 1
      %p47 = por %p45, %p46
      %p48 = scmp.ne.s32.totalorder %s37, %s38
      %p49 = scmp.eq.s32.totalorder %s15, 0
      %p50 = por %p48, %p49
      %p51 = scmp.ne.s32.totalorder %s37, %s38
      %p52 = scmp.eq.s32.totalorder %s16, 1
      %p53 = por %p51, %p52
      %p55 = scmp.ne.s32.totalorder %s38, %s54
      %p56 = scmp.eq.s32.totalorder %s16, 0
      %p57 = por %p55, %p56
      %s58 = sadd.s32 %s18, 1
      %s59 = smul.u32 %s58, 3
      %s60 = sadd.s32 %s25, 1
      %s61 = smul.u32 %s60, 3
      %s62 = ssub.s32 %s17, %s29
      %s63 = ssub.s32 %s59, %s61
      %s64 = sor.u32 %s62, %s63
      %p65 = scmp.eq.s32.totalorder %s64, 0
      %s67 = sadd.s32 %s66, 1
      %s68 = scalar_select %p65, %s66, %s67
      %p71 = pneg %p65
      %p72 = scmp.eq.s32.totalorder %s10, 1
      %p73 = por %p71, %p72
      %p74 = scmp.ne.s32.totalorder %s66, %s69
      %p75 = scmp.eq.s32.totalorder %s10, 0
      %p76 = por %p74, %p75
      %p77 = scmp.ne.s32.totalorder %s66, %s69
      %p78 = scmp.eq.s32.totalorder %s15, 1
      %p79 = por %p77, %p78
      %p80 = scmp.ne.s32.totalorder %s69, %s70
      %p81 = scmp.eq.s32.totalorder %s15, 0
      %p82 = por %p80, %p81
      %p83 = scmp.ne.s32.totalorder %s69, %s70
      %p84 = scmp.eq.s32.totalorder %s16, 1
      %p85 = por %p83, %p84
      %p87 = scmp.ne.s32.totalorder %s70, %s86
      %p88 = scmp.eq.s32.totalorder %s16, 0
      %p89 = por %p87, %p88
      %s91 = sadd.s32 %s90, 1
      %p94 = scmp.eq.s32.totalorder %s10, 1
      %p95 = scmp.ne.s32.totalorder %s90, %s92
      %p96 = scmp.eq.s32.totalorder %s10, 0
      %p97 = por %p95, %p96
      %p98 = scmp.ne.s32.totalorder %s90, %s92
      %p99 = scmp.eq.s32.totalorder %s15, 1
      %p100 = por %p98, %p99
      %p101 = scmp.ne.s32.totalorder %s92, %s93
      %p102 = scmp.eq.s32.totalorder %s15, 0
      %p103 = por %p101, %p102
      %p104 = scmp.ne.s32.totalorder %s92, %s93
      %p105 = scmp.eq.s32.totalorder %s16, 1
      %p106 = por %p104, %p105
      %p108 = scmp.ne.s32.totalorder %s93, %s107
      %p109 = scmp.eq.s32.totalorder %s16, 0
      %p110 = por %p108, %p109
      %s112 = sadd.s32 %s111, 1
      %p115 = scmp.eq.s32.totalorder %s10, 1
      %p116 = scmp.ne.s32.totalorder %s111, %s113
      %p117 = scmp.eq.s32.totalorder %s10, 0
      %p118 = por %p116, %p117
      %p119 = scmp.ne.s32.totalorder %s111, %s113
      %p120 = scmp.eq.s32.totalorder %s15, 1
      %p121 = por %p119, %p120
      %p122 = scmp.ne.s32.totalorder %s113, %s114
      %p123 = scmp.eq.s32.totalorder %s15, 0
      %p124 = por %p122, %p123
      %p125 = scmp.ne.s32.totalorder %s113, %s114
      %p126 = scmp.eq.s32.totalorder %s16, 1
      %p127 = por %p125, %p126
      %p129 = scmp.ne.s32.totalorder %s114, %s128
      %p130 = scmp.eq.s32.totalorder %s16, 0
      %p131 = por %p129, %p130
      %s132 = ssub.s32 %s17, %s29
      %s133 = ssub.s32 %s18, %s25
      %s134 = sor.u32 %s132, %s133
      %p135 = scmp.eq.s32.totalorder %s134, 0
      %s137 = sadd.s32 %s136, 1
      %s138 = scalar_select %p135, %s136, %s137
      %p141 = pneg %p135
      %p142 = scmp.eq.s32.totalorder %s10, 1
      %p143 = por %p141, %p142
      %p144 = scmp.ne.s32.totalorder %s136, %s139
      %p145 = scmp.eq.s32.totalorder %s10, 0
      %p146 = por %p144, %p145
      %p147 = scmp.ne.s32.totalorder %s136, %s139
      %p148 = scmp.eq.s32.totalorder %s15, 1
      %p149 = por %p147, %p148
      %p150 = scmp.ne.s32.totalorder %s139, %s140
      %p151 = scmp.eq.s32.totalorder %s15, 0
      %p152 = por %p150, %p151
      %p153 = scmp.ne.s32.totalorder %s139, %s140
      %p154 = scmp.eq.s32.totalorder %s16, 1
      %p155 = por %p153, %p154
      %p157 = scmp.ne.s32.totalorder %s140, %s156
      %p158 = scmp.eq.s32.totalorder %s16, 0
      %p159 = por %p157, %p158
      %p160 = scmp.le.s32.totalorder 1, %s10
      %p161 = scmp.lt.s32.totalorder %s10, 3
      %p162 = pnand %p160, %p161
      %p163 = pneg %p162
      // Predicated region
      $region9: #{conv3x3_relu_pallas.1} parent=5 // pred_check
        _
      $region10: #{conv3x3_relu_pallas.1} parent=5 // pred_check_branch
        %165 = sbr.rel (%p162) target = $region12
      $region11: #{conv3x3_relu_pallas.1} parent=5 // pred_region
        %s166 = ssub.s32 %s10, 1
        // Predicated region
        $region13: #{conv3x3_relu_pallas.1} parent=11 // pred_check
          %p167 = pneg %p103
        $region14: #{conv3x3_relu_pallas.1} parent=11 // pred_check_branch
          %169 = sbr.rel (%p167) target = $region16
        $region15: #{conv3x3_relu_pallas.1} parent=11 // pred_region
          _
        $region16: #{conv3x3_relu_pallas.1} parent=11 // pred_fallthru
          _
        // Predicated region
        $region17: #{conv3x3_relu_pallas.1} parent=11 // pred_check
          %p170 = pneg %p124
        $region18: #{conv3x3_relu_pallas.1} parent=11 // pred_check_branch
          %172 = sbr.rel (%p170) target = $region20
        $region19: #{conv3x3_relu_pallas.1} parent=11 // pred_region
          _
        $region20: #{conv3x3_relu_pallas.1} parent=11 // pred_fallthru
          _
      $region12: #{conv3x3_relu_pallas.1} parent=5 // pred_fallthru
        _
      %p173 = scmp.lt.s32.totalorder %s10, 2
      // Predicated region
      $region21: #{conv3x3_relu_pallas.1} parent=5 // pred_check
        %p174 = pneg %p173
      $region22: #{conv3x3_relu_pallas.1} parent=5 // pred_check_branch
        %176 = sbr.rel (%p174) target = $region24
      $region23: #{conv3x3_relu_pallas.1} parent=5 // pred_region
        // Predicated region
        $region25: #{conv3x3_relu_pallas.1} parent=23 // pred_check
          %p177 = pneg %p44
        $region26: #{conv3x3_relu_pallas.1} parent=23 // pred_check_branch
          %179 = sbr.rel (%p177) target = $region28
        $region27: #{conv3x3_relu_pallas.1} parent=23 // pred_region
          %s180 = sand.u32 %s34, 1
          %s181 = sand.u32 %s34, 1
          %s182 = smul.addr %s181, 24
          %s183 = scalar_lea.vmem [#allocation3], %s182
          %s184 = smul.u32 3, %s18
          %s185 = smul.addr %s17, 12
          %s186 = sadd.s32 %s184, %s185
          %s187 = smul.addr %s186, 4
          %s188 = scalar_lea.vmem %s0, %s187
          // Predicated region
          $region29: #{conv3x3_relu_pallas.1} parent=27 // pred_check
            _
          $region30: #{conv3x3_relu_pallas.1} parent=27 // pred_check_branch
            %190 = sbr.rel (0) target = $region32
          $region31: #{conv3x3_relu_pallas.1} parent=27 // pred_region
            // Predicated region
            $region33: #{conv3x3_relu_pallas.1} parent=31 // pred_check
              _
            $region34: #{conv3x3_relu_pallas.1} parent=31 // pred_check_branch
              %192 = sbr.rel (0) target = $region36
            $region35: #{conv3x3_relu_pallas.1} parent=31 // pred_region
              %s193 = scalar_lea.vmem %s188, 8
              %s194 = scalar_lea.vmem %s183, 8 [#allocation3]
              loop: start=0, step=1, limit=1
              $region37: #{conv3x3_relu_pallas.1} parent=35 // loop_pre_header
                _
              $region38: #{conv3x3_relu_pallas.1} parent=35 // loop_header
                %s196 = sphi 0, %s200
                %p197 = scmp.ge.s32.totalorder %s196, 1
                %s201 = sphi %s188, %s188
                %s202 = sphi %s183, %s183
              $region39: #{conv3x3_relu_pallas.1} parent=35 // loop_header_branch
                %199 = sbr.rel (%p197) target = $region43
              $region40: #{conv3x3_relu_pallas.1} parent=35 // loop_body
                %v203 = vld [vmem:[%s201] sm:$0xff]
                %204 = vst [vmem:[%s202] sm:$0xff] %v203
                %v205 = vld [vmem:[%s201 + $0x18] sm:$0xff]
                %206 = vst [vmem:[%s202 + $0xc] sm:$0xff] %v205
              $region41: #{conv3x3_relu_pallas.1} parent=35 // loop_footer
                %s200 = sadd.s32 1, %s196
              $region42: #{conv3x3_relu_pallas.1} parent=35 // loop_footer_branch
                %195 = sbr.rel target = $region38
              $region43: #{conv3x3_relu_pallas.1} parent=35 // loop_exit
                _
              %s208 = ssub.s32 16, 1
              loop: start=0, step=1, limit=1
              $region44: #{conv3x3_relu_pallas.1} parent=35 // loop_pre_header
                _
              $region45: #{conv3x3_relu_pallas.1} parent=35 // loop_header
                %s210 = sphi 0, %s214
                %p211 = scmp.ge.s32.totalorder %s210, 1
                %s215 = sphi %s193, %s193
                %s216 = sphi %s194, %s194
              $region46: #{conv3x3_relu_pallas.1} parent=35 // loop_header_branch
                %213 = sbr.rel (%p211) target = $region50
              $region47: #{conv3x3_relu_pallas.1} parent=35 // loop_body
                %v217 = vld [vmem:[%s215] sm:%s208]
                %218 = vst [vmem:[%s216] sm:%s208] %v217
                %v219 = vld [vmem:[%s215 + $0x18] sm:%s208]
                %220 = vst [vmem:[%s216 + $0xc] sm:%s208] %v219
              $region48: #{conv3x3_relu_pallas.1} parent=35 // loop_footer
                %s214 = sadd.s32 1, %s210
              $region49: #{conv3x3_relu_pallas.1} parent=35 // loop_footer_branch
                %209 = sbr.rel target = $region45
              $region50: #{conv3x3_relu_pallas.1} parent=35 // loop_exit
                _
            $region36: #{conv3x3_relu_pallas.1} parent=31 // pred_fallthru
              _
          $region32: #{conv3x3_relu_pallas.1} parent=27 // pred_fallthru
            _
          %221 = vnop
        $region28: #{conv3x3_relu_pallas.1} parent=23 // pred_fallthru
          _
        // Predicated region
        $region51: #{conv3x3_relu_pallas.1} parent=23 // pred_check
          %p222 = pneg %p76
        $region52: #{conv3x3_relu_pallas.1} parent=23 // pred_check_branch
          %224 = sbr.rel (%p222) target = $region54
        $region53: #{conv3x3_relu_pallas.1} parent=23 // pred_region
          %s225 = sand.u32 %s66, 1
          %s226 = sand.u32 %s66, 1
          %s227 = smul.addr %s226, 8
          %s228 = scalar_lea.vmem [#allocation4], %s227
          %s229 = sadd.s32 %s18, 1
          %s230 = smul.u32 %s229, 3
          %s231 = smul.addr %s17, 12
          %s232 = sadd.s32 %s230, %s231
          %s233 = smul.addr %s232, 4
          %s234 = scalar_lea.vmem %s1, %s233
          // Predicated region
          $region55: #{conv3x3_relu_pallas.1} parent=53 // pred_check
            _
          $region56: #{conv3x3_relu_pallas.1} parent=53 // pred_check_branch
            %236 = sbr.rel (0) target = $region58
          $region57: #{conv3x3_relu_pallas.1} parent=53 // pred_region
            // Predicated region
            $region59: #{conv3x3_relu_pallas.1} parent=57 // pred_check
              _
            $region60: #{conv3x3_relu_pallas.1} parent=57 // pred_check_branch
              %238 = sbr.rel target = $region62
            $region61: #{conv3x3_relu_pallas.1} parent=57 // pred_region
              // Predicated region
              $region74: #{conv3x3_relu_pallas.1} parent=61 // pred_check
                _
              $region75: #{conv3x3_relu_pallas.1} parent=61 // pred_check_branch
                %256 = sbr.rel (0) target = $region77
              $region76: #{conv3x3_relu_pallas.1} parent=61 // pred_region
                loop: start=0, step=1, limit=1
                $region78: #{conv3x3_relu_pallas.1} parent=76 // loop_pre_header
                  _
                $region79: #{conv3x3_relu_pallas.1} parent=76 // loop_header
                  %s258 = sphi 0, %s262
                  %p259 = scmp.ge.s32.totalorder %s258, 1
                  %s263 = sphi %s234, %s234
                  %s264 = sphi %s228, %s228
                $region80: #{conv3x3_relu_pallas.1} parent=76 // loop_header_branch
                  %261 = sbr.rel (%p259) target = $region84
                $region81: #{conv3x3_relu_pallas.1} parent=76 // loop_body
                  _
                $region82: #{conv3x3_relu_pallas.1} parent=76 // loop_footer
                  %s262 = sadd.s32 1, %s258
                $region83: #{conv3x3_relu_pallas.1} parent=76 // loop_footer_branch
                  %257 = sbr.rel target = $region79
                $region84: #{conv3x3_relu_pallas.1} parent=76 // loop_exit
                  _
                %s266 = ssub.s32 16, 1
                loop: start=0, step=1, limit=1
                $region85: #{conv3x3_relu_pallas.1} parent=76 // loop_pre_header
                  _
                $region86: #{conv3x3_relu_pallas.1} parent=76 // loop_header
                  %s268 = sphi 0, %s272
                  %p269 = scmp.ge.s32.totalorder %s268, 1
                  %s273 = sphi %s234, %s234
                  %s274 = sphi %s228, %s228
                $region87: #{conv3x3_relu_pallas.1} parent=76 // loop_header_branch
                  %271 = sbr.rel (%p269) target = $region91
                $region88: #{conv3x3_relu_pallas.1} parent=76 // loop_body
                  %v275 = vld [vmem:[%s273] sm:%s266]
                  %276 = vst [vmem:[%s274] sm:%s266] %v275
                  %v277 = vld [vmem:[%s273 + $0x18] sm:%s266]
                  %278 = vst [vmem:[%s274 + $0x4] sm:%s266] %v277
                $region89: #{conv3x3_relu_pallas.1} parent=76 // loop_footer
                  %s272 = sadd.s32 1, %s268
                $region90: #{conv3x3_relu_pallas.1} parent=76 // loop_footer_branch
                  %267 = sbr.rel target = $region86
                $region91: #{conv3x3_relu_pallas.1} parent=76 // loop_exit
                  _
              $region77: #{conv3x3_relu_pallas.1} parent=61 // pred_fallthru
                _
            $region62: #{conv3x3_relu_pallas.1} parent=57 // pred_fallthru
              _
            // Predicated region
            $region63: #{conv3x3_relu_pallas.1} parent=57 // pred_check
              _
            $region64: #{conv3x3_relu_pallas.1} parent=57 // pred_check_branch
              %240 = sbr.rel (0) target = $region66
            $region65: #{conv3x3_relu_pallas.1} parent=57 // pred_region
              %s242 = ssub.s32 16, 1
              loop: start=0, step=1, limit=1
              $region67: #{conv3x3_relu_pallas.1} parent=65 // loop_pre_header
                _
              $region68: #{conv3x3_relu_pallas.1} parent=65 // loop_header
                %s244 = sphi 0, %s248
                %p245 = scmp.ge.s32.totalorder %s244, 1
                %s249 = sphi %s234, %s234
                %s250 = sphi %s228, %s228
              $region69: #{conv3x3_relu_pallas.1} parent=65 // loop_header_branch
                %247 = sbr.rel (%p245) target = $region73
              $region70: #{conv3x3_relu_pallas.1} parent=65 // loop_body
                %v251 = vld [vmem:[%s249] sm:%s242]
                %252 = vst [vmem:[%s250] sm:%s242] %v251
                %v253 = vld [vmem:[%s249 + $0x18] sm:%s242]
                %254 = vst [vmem:[%s250 + $0x4] sm:%s242] %v253
              $region71: #{conv3x3_relu_pallas.1} parent=65 // loop_footer
                %s248 = sadd.s32 1, %s244
              $region72: #{conv3x3_relu_pallas.1} parent=65 // loop_footer_branch
                %243 = sbr.rel target = $region68
              $region73: #{conv3x3_relu_pallas.1} parent=65 // loop_exit
                _
            $region66: #{conv3x3_relu_pallas.1} parent=57 // pred_fallthru
              _
          $region58: #{conv3x3_relu_pallas.1} parent=53 // pred_fallthru
            _
          %279 = vnop
        $region54: #{conv3x3_relu_pallas.1} parent=23 // pred_fallthru
          _
      $region24: #{conv3x3_relu_pallas.1} parent=5 // pred_fallthru
        _
      %p280 = scmp.le.s32.totalorder 1, %s10
      %p281 = scmp.lt.s32.totalorder %s10, 3
      %p282 = pnand %p280, %p281
      %p283 = pneg %p282
      // Predicated region
      $region92: #{conv3x3_relu_pallas.1} parent=5 // pred_check
        _
      $region93: #{conv3x3_relu_pallas.1} parent=5 // pred_check_branch
        %285 = sbr.rel (%p282) target = $region95
      $region94: #{conv3x3_relu_pallas.1} parent=5 // pred_region
        %s286 = ssub.s32 %s10, 1
        %s287 = sand.u32 %s37, 1
        %s288 = sand.u32 %s37, 1
        %s289 = smul.addr %s288, 24
        %s290 = scalar_lea.vmem [#allocation3], %s289
        // Predicated region
        $region96: #{conv3x3_relu_pallas.1} parent=94 // pred_check
          %p291 = pneg %p50
        $region97: #{conv3x3_relu_pallas.1} parent=94 // pred_check_branch
          %293 = sbr.rel (%p291) target = $region99
        $region98: #{conv3x3_relu_pallas.1} parent=94 // pred_region
          _
        $region99: #{conv3x3_relu_pallas.1} parent=94 // pred_fallthru
          _
        %s294 = sand.u32 %s69, 1
        %s295 = sand.u32 %s69, 1
        %s296 = smul.addr %s295, 8
        %s297 = scalar_lea.vmem [#allocation4], %s296
        // Predicated region
        $region100: #{conv3x3_relu_pallas.1} parent=94 // pred_check
          %p298 = pneg %p82
        $region101: #{conv3x3_relu_pallas.1} parent=94 // pred_check_branch
          %300 = sbr.rel (%p298) target = $region103
        $region102: #{conv3x3_relu_pallas.1} parent=94 // pred_region
          _
        $region103: #{conv3x3_relu_pallas.1} parent=94 // pred_fallthru
          _
        %s301 = sand.u32 %s37, 1
        %s302 = sand.u32 %s37, 1
        %s303 = smul.addr %s302, 24
        %s304 = scalar_lea.vmem [#allocation3], %s303
        %p305 = pneg %p50
        %p306 = pneg %p47
        %s307 = sand.u32 %s69, 1
        %s308 = sand.u32 %s69, 1
        %s309 = smul.addr %s308, 8
        %s310 = scalar_lea.vmem [#allocation4], %s309
        %p311 = pneg %p82
        %p312 = pneg %p79
        %p313 = pneg %p103
        %p314 = pneg %p100
        %p315 = pneg %p124
        %p316 = pneg %p121
        %p317 = pneg %p152
        %p318 = pneg %p149
        %s319 = smul.u32 3, %s20
        %p320 = scmp.lt.s32.totalorder %s19, 1
        %s321 = scalar_select %p320, %s19, 1
        %p322 = scmp.lt.s32.totalorder %s319, 2
        %s323 = scalar_select %p322, %s319, 2
        %s324 = smul.addr %s321, 3
        %s325 = sadd.s32 %s323, %s324
        %s326 = smul.addr %s325, 4
        %s327 = scalar_lea.vmem %s4, %s326
        %s328 = smul.u32 3, %s20
        %s329 = sadd.s32 %s20, 1
        %s330 = smul.u32 %s329, 3
        %s331 = smul.u32 3, %s20
        %p332 = scmp.lt.s32.totalorder %s19, 1
        %s333 = scalar_select %p332, %s19, 1
        %p334 = scmp.lt.s32.totalorder %s331, 2
        %s335 = scalar_select %p334, %s331, 2
        %s336 = smul.addr %s333, 3
        %s337 = sadd.s32 %s335, %s336
        %s338 = smul.addr %s337, 4
        %s339 = scalar_lea.vmem %s4, %s338
        %s340 = smul.u32 3, %s20
        %v342 = vld [vmem:[%s290] sm:$0xff]
        %v343 = vld [vmem:[%s290 + $0x8] sm:$0xf]
        %v344 = vld [vmem:[%s290 + $0xc] sm:$0xff]
        %v345 = vld [vmem:[%s290 + $0x14] sm:$0xf]
        %v346 = vld [vmem:[%s297] sm:$0xf]
        %v347 = vld [vmem:[%s297 + $0x4] sm:$0xf]
        %348 = vst [vmem:[#allocation2] sm:$0xff] %v342
        %349 = vst [vmem:[#allocation2 + $0x8] sm:$0xf] %v343
        %350 = vst [vmem:[#allocation2 + $0xc] sm:$0xff] %v344
        %351 = vst [vmem:[#allocation2 + $0x14] sm:$0xf] %v345
        %356 = vrot.lane.b32.xlu0 %v342, 127
        %v357 = vpop.permute.xlu0 %356
        %358 = vrot.lane.b32.xlu0 %v343, 127
        %v359 = vpop.permute.xlu0 %358
        %360 = vrot.lane.b32.xlu0 %v344, 127
        %v361 = vpop.permute.xlu0 %360
        %362 = vrot.lane.b32.xlu0 %v345, 127
        %v363 = vpop.permute.xlu0 %362
        %v364 = vrot.slane %v357, 4
        %v365 = vrot.slane %v359, 4
        %v366 = vrot.slane %v361, 4
        %v367 = vrot.slane %v363, 4
        %vm368 = vcmask 1043456
        %v369 = vsel %vm368, %v364, %v365
        %vm370 = vcmask 1039360
        %v371 = vsel %vm370, %v357, %v369
        %v372 = vsel %vm368, %v366, %v367
        %v373 = vsel %vm370, %v361, %v372
        %378 = vst [vmem:[#allocation2 + $0x18] sm:$0xff] %v371
        %vm379 = vcmask 1035264
        %380 = vst.msk [vmem:[#allocation2 + $0x20] sm:$0xf] %vm379, %v359
        %381 = vst [vmem:[#allocation2 + $0x24] sm:$0xff] %v373
        %382 = vst.msk [vmem:[#allocation2 + $0x2c] sm:$0xf] %vm379, %v363
        %385 = vrot.lane.b32.xlu0 %v346, 127
        %v386 = vpop.permute.xlu0 %385
        %387 = vrot.lane.b32.xlu0 %v347, 127
        %v388 = vpop.permute.xlu0 %387
        %vm391 = vcmask 1044472
        %392 = vst.msk [vmem:[#allocation2 + $0x20] sm:$0xf] %vm391, %v386
        %393 = vst.msk [vmem:[#allocation2 + $0x2c] sm:$0xf] %vm391, %v388
        %394 = vrot.lane.b32.xlu0 %v342, 126
        %v395 = vpop.permute.xlu0 %394
        %396 = vrot.lane.b32.xlu0 %v343, 126
        %v397 = vpop.permute.xlu0 %396
        %398 = vrot.lane.b32.xlu0 %v344, 126
        %v399 = vpop.permute.xlu0 %398
        %400 = vrot.lane.b32.xlu0 %v345, 126
        %v401 = vpop.permute.xlu0 %400
        %v402 = vrot.slane %v395, 4
        %v403 = vrot.slane %v397, 4
        %v404 = vrot.slane %v399, 4
        %v405 = vrot.slane %v401, 4
        %v406 = vsel %vm368, %v402, %v403
        %vm407 = vcmask 1031168
        %v408 = vsel %vm407, %v395, %v406
        %v409 = vsel %vm368, %v404, %v405
        %v410 = vsel %vm407, %v399, %v409
        %415 = vst [vmem:[#allocation2 + $0x30] sm:$0xff] %v408
        %vm416 = vcmask 1027072
        %417 = vst.msk [vmem:[#allocation2 + $0x38] sm:$0xf] %vm416, %v397
        %418 = vst [vmem:[#allocation2 + $0x3c] sm:$0xff] %v410
        %419 = vst.msk [vmem:[#allocation2 + $0x44] sm:$0xf] %vm416, %v401
        %420 = vrot.lane.b32.xlu0 %v346, 126
        %v421 = vpop.permute.xlu0 %420
        %422 = vrot.lane.b32.xlu0 %v347, 126
        %v423 = vpop.permute.xlu0 %422
        %vm426 = vcmask 1044464
        %427 = vst.msk [vmem:[#allocation2 + $0x38] sm:$0xf] %vm426, %v421
        %428 = vst.msk [vmem:[#allocation2 + $0x44] sm:$0xf] %vm426, %v423
        %429 = vrot.lane.b32.xlu0 %v342, 110
        %v430 = vpop.permute.xlu0 %429
        %431 = vrot.lane.b32.xlu0 %v343, 110
        %v432 = vpop.permute.xlu0 %431
        %433 = vrot.lane.b32.xlu0 %v344, 110
        %v434 = vpop.permute.xlu0 %433
        %435 = vrot.lane.b32.xlu0 %v345, 110
        %v436 = vpop.permute.xlu0 %435
        %v437 = vrot.slane %v430, 4
        %v438 = vrot.slane %v432, 4
        %v439 = vrot.slane %v434, 4
        %v440 = vrot.slane %v436, 4
        %v441 = vsel %vm368, %v437, %v438
        %vm442 = vcmask 900096
        %v443 = vsel %vm442, %v430, %v441
        %v444 = vsel %vm368, %v439, %v440
        %v445 = vsel %vm442, %v434, %v444
        %450 = vst [vmem:[#allocation2 + $0x48] sm:$0xff] %v443
        %vm451 = vcmask 896000
        %452 = vst.msk [vmem:[#allocation2 + $0x50] sm:$0xf] %vm451, %v432
        %453 = vst [vmem:[#allocation2 + $0x54] sm:$0xff] %v445
        %454 = vst.msk [vmem:[#allocation2 + $0x5c] sm:$0xf] %vm451, %v436
        %455 = vrot.lane.b32.xlu0 %v346, 110
        %v456 = vpop.permute.xlu0 %455
        %457 = vrot.lane.b32.xlu0 %v347, 110
        %v458 = vpop.permute.xlu0 %457
        %vm461 = vcmask 1044336
        %462 = vst.msk [vmem:[#allocation2 + $0x50] sm:$0xf] %vm461, %v456
        %463 = vst.msk [vmem:[#allocation2 + $0x5c] sm:$0xf] %vm461, %v458
        %464 = vrot.lane.b32.xlu0 %v342, 109
        %v465 = vpop.permute.xlu0 %464
        %466 = vrot.lane.b32.xlu0 %v343, 109
        %v467 = vpop.permute.xlu0 %466
        %468 = vrot.lane.b32.xlu0 %v344, 109
        %v469 = vpop.permute.xlu0 %468
        %470 = vrot.lane.b32.xlu0 %v345, 109
        %v471 = vpop.permute.xlu0 %470
        %v472 = vrot.slane %v465, 4
        %v473 = vrot.slane %v467, 4
        %v474 = vrot.slane %v469, 4
        %v475 = vrot.slane %v471, 4
        %v476 = vsel %vm368, %v472, %v473
        %vm477 = vcmask 891904
        %v478 = vsel %vm477, %v465, %v476
        %v479 = vsel %vm368, %v474, %v475
        %v480 = vsel %vm477, %v469, %v479
        %485 = vst [vmem:[#allocation2 + $0x60] sm:$0xff] %v478
        %vm486 = vcmask 887808
        %487 = vst.msk [vmem:[#allocation2 + $0x68] sm:$0xf] %vm486, %v467
        %488 = vst [vmem:[#allocation2 + $0x6c] sm:$0xff] %v480
        %489 = vst.msk [vmem:[#allocation2 + $0x74] sm:$0xf] %vm486, %v471
        %490 = vrot.lane.b32.xlu0 %v346, 109
        %v491 = vpop.permute.xlu0 %490
        %492 = vrot.lane.b32.xlu0 %v347, 109
        %v493 = vpop.permute.xlu0 %492
        %vm496 = vcmask 1044328
        %497 = vst.msk [vmem:[#allocation2 + $0x68] sm:$0xf] %vm496, %v491
        %498 = vst.msk [vmem:[#allocation2 + $0x74] sm:$0xf] %vm496, %v493
        %499 = vrot.lane.b32.xlu0 %v342, 108
        %v500 = vpop.permute.xlu0 %499
        %501 = vrot.lane.b32.xlu0 %v343, 108
        %v502 = vpop.permute.xlu0 %501
        %503 = vrot.lane.b32.xlu0 %v344, 108
        %v504 = vpop.permute.xlu0 %503
        %505 = vrot.lane.b32.xlu0 %v345, 108
        %v506 = vpop.permute.xlu0 %505
        %v507 = vrot.slane %v500, 4
        %v508 = vrot.slane %v502, 4
        %v509 = vrot.slane %v504, 4
        %v510 = vrot.slane %v506, 4
        %v511 = vsel %vm368, %v507, %v508
        %vm512 = vcmask 883712
        %v513 = vsel %vm512, %v500, %v511
        %v514 = vsel %vm368, %v509, %v510
        %v515 = vsel %vm512, %v504, %v514
        %520 = vst [vmem:[#allocation2 + $0x78] sm:$0xff] %v513
        %vm521 = vcmask 879616
        %522 = vst.msk [vmem:[#allocation2 + $0x80] sm:$0xf] %vm521, %v502
        %523 = vst [vmem:[#allocation2 + $0x84] sm:$0xff] %v515
        %524 = vst.msk [vmem:[#allocation2 + $0x8c] sm:$0xf] %vm521, %v506
        %525 = vrot.lane.b32.xlu0 %v346, 108
        %v526 = vpop.permute.xlu0 %525
        %527 = vrot.lane.b32.xlu0 %v347, 108
        %v528 = vpop.permute.xlu0 %527
        %vm531 = vcmask 1044320
        %532 = vst.msk [vmem:[#allocation2 + $0x80] sm:$0xf] %vm531, %v526
        %533 = vst.msk [vmem:[#allocation2 + $0x8c] sm:$0xf] %vm531, %v528
        %534 = vrot.lane.b32.xlu0 %v342, 92
        %v535 = vpop.permute.xlu0 %534
        %536 = vrot.lane.b32.xlu0 %v343, 92
        %v537 = vpop.permute.xlu0 %536
        %538 = vrot.lane.b32.xlu0 %v344, 92
        %v539 = vpop.permute.xlu0 %538
        %540 = vrot.lane.b32.xlu0 %v345, 92
        %v541 = vpop.permute.xlu0 %540
        %v542 = vrot.slane %v535, 4
        %v543 = vrot.slane %v537, 4
        %v544 = vrot.slane %v539, 4
        %v545 = vrot.slane %v541, 4
        %v546 = vsel %vm368, %v542, %v543
        %vm547 = vcmask 752640
        %v548 = vsel %vm547, %v535, %v546
        %v549 = vsel %vm368, %v544, %v545
        %v550 = vsel %vm547, %v539, %v549
        %555 = vst [vmem:[#allocation2 + $0x90] sm:$0xff] %v548
        %vm556 = vcmask 748544
        %557 = vst.msk [vmem:[#allocation2 + $0x98] sm:$0xf] %vm556, %v537
        %558 = vst [vmem:[#allocation2 + $0x9c] sm:$0xff] %v550
        %559 = vst.msk [vmem:[#allocation2 + $0xa4] sm:$0xf] %vm556, %v541
        %560 = vrot.lane.b32.xlu0 %v346, 92
        %v561 = vpop.permute.xlu0 %560
        %562 = vrot.lane.b32.xlu0 %v347, 92
        %v563 = vpop.permute.xlu0 %562
        %vm566 = vcmask 1044192
        %567 = vst.msk [vmem:[#allocation2 + $0x98] sm:$0xf] %vm566, %v561
        %568 = vst.msk [vmem:[#allocation2 + $0xa4] sm:$0xf] %vm566, %v563
        %569 = vrot.lane.b32.xlu0 %v342, 91
        %v570 = vpop.permute.xlu0 %569
        %571 = vrot.lane.b32.xlu0 %v343, 91
        %v572 = vpop.permute.xlu0 %571
        %573 = vrot.lane.b32.xlu0 %v344, 91
        %v574 = vpop.permute.xlu0 %573
        %575 = vrot.lane.b32.xlu0 %v345, 91
        %v576 = vpop.permute.xlu0 %575
        %v577 = vrot.slane %v570, 4
        %v578 = vrot.slane %v572, 4
        %v579 = vrot.slane %v574, 4
        %v580 = vrot.slane %v576, 4
        %v581 = vsel %vm368, %v577, %v578
        %vm582 = vcmask 744448
        %v583 = vsel %vm582, %v570, %v581
        %v584 = vsel %vm368, %v579, %v580
        %v585 = vsel %vm582, %v574, %v584
        %590 = vst [vmem:[#allocation2 + $0xa8] sm:$0xff] %v583
        %vm591 = vcmask 740352
        %592 = vst.msk [vmem:[#allocation2 + $0xb0] sm:$0xf] %vm591, %v572
        %593 = vst [vmem:[#allocation2 + $0xb4] sm:$0xff] %v585
        %594 = vst.msk [vmem:[#allocation2 + $0xbc] sm:$0xf] %vm591, %v576
        %595 = vrot.lane.b32.xlu0 %v346, 91
        %v596 = vpop.permute.xlu0 %595
        %597 = vrot.lane.b32.xlu0 %v347, 91
        %v598 = vpop.permute.xlu0 %597
        %vm601 = vcmask 1044184
        %602 = vst.msk [vmem:[#allocation2 + $0xb0] sm:$0xf] %vm601, %v596
        %603 = vst.msk [vmem:[#allocation2 + $0xbc] sm:$0xf] %vm601, %v598
        %604 = vrot.lane.b32.xlu0 %v342, 90
        %v605 = vpop.permute.xlu0 %604
        %606 = vrot.lane.b32.xlu0 %v343, 90
        %v607 = vpop.permute.xlu0 %606
        %608 = vrot.lane.b32.xlu0 %v344, 90
        %v609 = vpop.permute.xlu0 %608
        %610 = vrot.lane.b32.xlu0 %v345, 90
        %v611 = vpop.permute.xlu0 %610
        %v612 = vrot.slane %v605, 4
        %v613 = vrot.slane %v607, 4
        %v614 = vrot.slane %v609, 4
        %v615 = vrot.slane %v611, 4
        %v616 = vsel %vm368, %v612, %v613
        %vm617 = vcmask 736256
        %v618 = vsel %vm617, %v605, %v616
        %v619 = vsel %vm368, %v614, %v615
        %v620 = vsel %vm617, %v609, %v619
        %625 = vst [vmem:[#allocation2 + $0xc0] sm:$0xff] %v618
        %vm626 = vcmask 732160
        %627 = vst.msk [vmem:[#allocation2 + $0xc8] sm:$0xf] %vm626, %v607
        %628 = vst [vmem:[#allocation2 + $0xcc] sm:$0xff] %v620
        %629 = vst.msk [vmem:[#allocation2 + $0xd4] sm:$0xf] %vm626, %v611
        %630 = vrot.lane.b32.xlu0 %v346, 90
        %v631 = vpop.permute.xlu0 %630
        %632 = vrot.lane.b32.xlu0 %v347, 90
        %v633 = vpop.permute.xlu0 %632
        %vm636 = vcmask 1044176
        %637 = vst.msk [vmem:[#allocation2 + $0xc8] sm:$0xf] %vm636, %v631
        %638 = vst.msk [vmem:[#allocation2 + $0xd4] sm:$0xf] %vm636, %v633
        %v639 = vld [vmem:[%s2] sm:$0xff]
        %v640 = vld [vmem:[#allocation2] sm:$0xff]
        %v641 = vld [vmem:[#allocation2 + $0x8] sm:$0xf]
        %v642 = vld [vmem:[#allocation2 + $0xc] sm:$0xff]
        %v643 = vld [vmem:[#allocation2 + $0x14] sm:$0xf]
        %v644 = vld [vmem:[#allocation2 + $0x18] sm:$0xff]
        %v645 = vld [vmem:[#allocation2 + $0x20] sm:$0xf]
        %v646 = vld [vmem:[#allocation2 + $0x24] sm:$0xff]
        %v647 = vld [vmem:[#allocation2 + $0x2c] sm:$0xf]
        %v648 = vld [vmem:[#allocation2 + $0x30] sm:$0xff]
        %v649 = vld [vmem:[#allocation2 + $0x38] sm:$0xf]
        %v650 = vld [vmem:[#allocation2 + $0x3c] sm:$0xff]
        %v651 = vld [vmem:[#allocation2 + $0x44] sm:$0xf]
        %v652 = vld [vmem:[#allocation2 + $0x48] sm:$0xff]
        %v653 = vld [vmem:[#allocation2 + $0x50] sm:$0xf]
        %v654 = vld [vmem:[#allocation2 + $0x54] sm:$0xff]
        %v655 = vld [vmem:[#allocation2 + $0x5c] sm:$0xf]
        %v656 = vld [vmem:[#allocation2 + $0x60] sm:$0xff]
        %v657 = vld [vmem:[#allocation2 + $0x68] sm:$0xf]
        %v658 = vld [vmem:[#allocation2 + $0x6c] sm:$0xff]
        %v659 = vld [vmem:[#allocation2 + $0x74] sm:$0xf]
        %v660 = vld [vmem:[#allocation2 + $0x78] sm:$0xff]
        %v661 = vld [vmem:[#allocation2 + $0x80] sm:$0xf]
        %v662 = vld [vmem:[#allocation2 + $0x84] sm:$0xff]
        %v663 = vld [vmem:[#allocation2 + $0x8c] sm:$0xf]
        %v664 = vld [vmem:[#allocation2 + $0x90] sm:$0xff]
        %v665 = vld [vmem:[#allocation2 + $0x98] sm:$0xf]
        %v666 = vld [vmem:[#allocation2 + $0x9c] sm:$0xff]
        %v667 = vld [vmem:[#allocation2 + $0xa4] sm:$0xf]
        %v668 = vld [vmem:[#allocation2 + $0xa8] sm:$0xff]
        %v669 = vld [vmem:[#allocation2 + $0xb0] sm:$0xf]
        %v670 = vld [vmem:[#allocation2 + $0xb4] sm:$0xff]
        %v671 = vld [vmem:[#allocation2 + $0xbc] sm:$0xf]
        %v672 = vld [vmem:[#allocation2 + $0xc0] sm:$0xff]
        %v673 = vld [vmem:[#allocation2 + $0xc8] sm:$0xf]
        %v674 = vld [vmem:[#allocation2 + $0xcc] sm:$0xff]
        %v675 = vld [vmem:[#allocation2 + $0xd4] sm:$0xf]
        %v676 = vld [vmem:[%s3] sm:$0xff]
        %678 = vset.pattern.permute.xlu0 0
        %679 = vperm.xlu0 %678, %v676
        %v680 = vpop.permute.xlu0 %679
        %v683 = vunpack.c.l.b16 %v639
        %v684 = vunpack.c.h.b16 %v639
        %v685 = vpack.c.b16 %v683, %v683
        %v686 = vpack.c.b16 %v684, %v684
        %v724 = vunpack.c.l.b16 %v640
        %v725 = vunpack.c.h.b16 %v640
        %v726 = vunpack.c.l.b16 %v641
        %v727 = vunpack.c.l.b16 %v642
        %v728 = vunpack.c.h.b16 %v642
        %v729 = vunpack.c.l.b16 %v643
        %v730 = vunpack.c.l.b16 %v644
        %v731 = vunpack.c.h.b16 %v644
        %v732 = vunpack.c.l.b16 %v645
        %v733 = vunpack.c.l.b16 %v646
        %v734 = vunpack.c.h.b16 %v646
        %v735 = vunpack.c.l.b16 %v647
        %v736 = vunpack.c.l.b16 %v648
        %v737 = vunpack.c.h.b16 %v648
        %v738 = vunpack.c.l.b16 %v649
        %v739 = vunpack.c.l.b16 %v650
        %v740 = vunpack.c.h.b16 %v650
        %v741 = vunpack.c.l.b16 %v651
        %v742 = vunpack.c.l.b16 %v652
        %v743 = vunpack.c.h.b16 %v652
        %v744 = vunpack.c.l.b16 %v653
        %v745 = vunpack.c.l.b16 %v654
        %v746 = vunpack.c.h.b16 %v654
        %v747 = vunpack.c.l.b16 %v655
        %v748 = vunpack.c.l.b16 %v656
        %v749 = vunpack.c.h.b16 %v656
        %v750 = vunpack.c.l.b16 %v657
        %v751 = vunpack.c.l.b16 %v658
        %v752 = vunpack.c.h.b16 %v658
        %v753 = vunpack.c.l.b16 %v659
        %v754 = vunpack.c.l.b16 %v660
        %v755 = vunpack.c.h.b16 %v660
        %v756 = vunpack.c.l.b16 %v661
        %v757 = vunpack.c.l.b16 %v662
        %v758 = vunpack.c.h.b16 %v662
        %v759 = vunpack.c.l.b16 %v663
        %v760 = vunpack.c.l.b16 %v664
        %v761 = vunpack.c.h.b16 %v664
        %v762 = vunpack.c.l.b16 %v665
        %v763 = vunpack.c.l.b16 %v666
        %v764 = vunpack.c.h.b16 %v666
        %v765 = vunpack.c.l.b16 %v667
        %v766 = vunpack.c.l.b16 %v668
        %v767 = vunpack.c.h.b16 %v668
        %v768 = vunpack.c.l.b16 %v669
        %v769 = vunpack.c.l.b16 %v670
        %v770 = vunpack.c.h.b16 %v670
        %v771 = vunpack.c.l.b16 %v671
        %v772 = vunpack.c.l.b16 %v672
        %v773 = vunpack.c.h.b16 %v672
        %v774 = vunpack.c.l.b16 %v673
        %v775 = vunpack.c.l.b16 %v674
        %v776 = vunpack.c.h.b16 %v674
        %v777 = vunpack.c.l.b16 %v675
        %v778 = vpack.c.b16 %v727, %v724
        %v779 = vpack.c.b16 %v728, %v725
        %v780 = vpack.c.b16 %v729, %v726
        %v781 = vpack.c.b16 %v733, %v730
        %v782 = vpack.c.b16 %v734, %v731
        %v783 = vpack.c.b16 %v735, %v732
        %v784 = vpack.c.b16 %v739, %v736
        %v785 = vpack.c.b16 %v740, %v737
        %v786 = vpack.c.b16 %v741, %v738
        %v787 = vpack.c.b16 %v745, %v742
        %v788 = vpack.c.b16 %v746, %v743
        %v789 = vpack.c.b16 %v747, %v744
        %v790 = vpack.c.b16 %v751, %v748
        %v791 = vpack.c.b16 %v752, %v749
        %v792 = vpack.c.b16 %v753, %v750
        %v793 = vpack.c.b16 %v757, %v754
        %v794 = vpack.c.b16 %v758, %v755
        %v795 = vpack.c.b16 %v759, %v756
        %v796 = vpack.c.b16 %v763, %v760
        %v797 = vpack.c.b16 %v764, %v761
        %v798 = vpack.c.b16 %v765, %v762
        %v799 = vpack.c.b16 %v769, %v766
        %v800 = vpack.c.b16 %v770, %v767
        %v801 = vpack.c.b16 %v771, %v768
        %v802 = vpack.c.b16 %v775, %v772
        %v803 = vpack.c.b16 %v776, %v773
        %v804 = vpack.c.b16 %v777, %v774
        %vm832 = vcmask 130048
        %v834 = vsel %vm832, %v686, 0
        %836 = vmatpush.bf16.msra.mxu0 %v799
        %837 = vmatpush.bf16.msra.mxu0 %v796
        %838 = vmatpush.bf16.msra.mxu0 %v793
        %839 = vmatpush.bf16.msra.mxu0 %v790
        %840 = vmatpush.bf16.msra.mxu0 %v787
        %841 = vmatpush.bf16.msra.mxu0 %v784
        %842 = vmatpush.bf16.msra.mxu0 %v781
        %843 = vmatpush.bf16.msra.mxu0 %v778
        %844 = vmatmul.bf16.gmra.mxu0 %v685
        %v845 = vpop.f32.mrf.mxu0
        %v846 = vadd.f32 %v680, %v845
        %v847 = vpop.f32.mrf.mxu0
        %848 = vdwg.mxu0
        %849 = vmatpush.bf16.msra.mxu0 0
        %850 = vmatpush.bf16.msra.mxu0 0
        %851 = vmatpush.bf16.msra.mxu0 0
        %852 = vmatpush.bf16.msra.mxu0 0
        %853 = vmatpush.bf16.msra.mxu0 0
        %854 = vmatpush.bf16.msra.mxu0 0
        %855 = vmatpush.bf16.msra.mxu0 0
        %856 = vmatpush.bf16.msra.mxu0 %v802
        %857 = vmatmul.bf16.gmra.mxu0 %v834
        %v858 = vpop.f32.mrf.mxu0
        %v859 = vadd.f32 %v846, %v858
        %v860 = vpop.f32.mrf.mxu0
        %861 = vdwg.mxu0
        %862 = vmatpush.bf16.msra.mxu0 %v800
        %863 = vmatpush.bf16.msra.mxu0 %v797
        %864 = vmatpush.bf16.msra.mxu0 %v794
        %865 = vmatpush.bf16.msra.mxu0 %v791
        %866 = vmatpush.bf16.msra.mxu0 %v788
        %867 = vmatpush.bf16.msra.mxu0 %v785
        %868 = vmatpush.bf16.msra.mxu0 %v782
        %869 = vmatpush.bf16.msra.mxu0 %v779
        %870 = vmatmul.bf16.gmra.mxu0 %v685
        %v871 = vpop.f32.mrf.mxu0
        %v872 = vadd.f32 %v680, %v871
        %v873 = vpop.f32.mrf.mxu0
        %874 = vdwg.mxu0
        %875 = vmatpush.bf16.msra.mxu0 0
        %876 = vmatpush.bf16.msra.mxu0 0
        %877 = vmatpush.bf16.msra.mxu0 0
        %878 = vmatpush.bf16.msra.mxu0 0
        %879 = vmatpush.bf16.msra.mxu0 0
        %880 = vmatpush.bf16.msra.mxu0 0
        %881 = vmatpush.bf16.msra.mxu0 0
        %882 = vmatpush.bf16.msra.mxu0 %v803
        %883 = vmatmul.bf16.gmra.mxu0 %v834
        %v884 = vpop.f32.mrf.mxu0
        %v885 = vadd.f32 %v872, %v884
        %v886 = vpop.f32.mrf.mxu0
        %887 = vdwg.mxu0
        %888 = vmatpush.bf16.msra.mxu0 %v801
        %889 = vmatpush.bf16.msra.mxu0 %v798
        %890 = vmatpush.bf16.msra.mxu0 %v795
        %891 = vmatpush.bf16.msra.mxu0 %v792
        %892 = vmatpush.bf16.msra.mxu0 %v789
        %893 = vmatpush.bf16.msra.mxu0 %v786
        %894 = vmatpush.bf16.msra.mxu0 %v783
        %895 = vmatpush.bf16.msra.mxu0 %v780
        %896 = vmatmul.bf16.gmra.mxu0 %v685
        %v897 = vpop.f32.mrf.mxu0
        %v898 = vadd.f32 %v680, %v897
        %v899 = vpop.f32.mrf.mxu0
        %900 = vdwg.mxu0
        %901 = vmatpush.bf16.msra.mxu0 0
        %902 = vmatpush.bf16.msra.mxu0 0
        %903 = vmatpush.bf16.msra.mxu0 0
        %904 = vmatpush.bf16.msra.mxu0 0
        %905 = vmatpush.bf16.msra.mxu0 0
        %906 = vmatpush.bf16.msra.mxu0 0
        %907 = vmatpush.bf16.msra.mxu0 0
        %908 = vmatpush.bf16.msra.mxu0 %v804
        %909 = vmatmul.bf16.gmra.mxu0 %v834
        %v910 = vpop.f32.mrf.mxu0
        %v911 = vadd.f32 %v898, %v910
        %v912 = vpop.f32.mrf.mxu0
        %913 = vdwg.mxu0
        %v914 = vmax.f32 %v859, 0.0
        %v915 = vmax.f32 %v885, 0.0
        %v916 = vmax.f32 %v911, 0.0
        %v917 = vpack.c.bf16 %v915, %v914
        %v918 = vpack.c.bf16 %v916, %v916
        %919 = vst [vmem:[%s339] sm:$0xff] %v917
        %920 = vst [vmem:[%s339 + $0x8] sm:$0xf] %v918
        %s921 = smul.u32 3, %s20
        %p922 = scmp.lt.s32.totalorder %s19, 1
        %s923 = scalar_select %p922, %s19, 1
        %p924 = scmp.lt.s32.totalorder %s921, 2
        %s925 = scalar_select %p924, %s921, 2
        %s926 = smul.addr %s923, 3
        %s927 = sadd.s32 %s925, %s926
        %s928 = smul.addr %s927, 4
        %s929 = scalar_lea.vmem %s4, %s928
        // Predicated region
        $region104: #{conv3x3_relu_pallas.1} parent=94 // pred_check
          %p930 = pneg %p149
        $region105: #{conv3x3_relu_pallas.1} parent=94 // pred_check_branch
          %932 = sbr.rel (%p930) target = $region107
        $region106: #{conv3x3_relu_pallas.1} parent=94 // pred_region
          %s933 = smul.u32 3, %s20
        $region107: #{conv3x3_relu_pallas.1} parent=94 // pred_fallthru
          _
      $region95: #{conv3x3_relu_pallas.1} parent=5 // pred_fallthru
        _
      %p934 = scmp.le.s32.totalorder 2, %s10
      // Predicated region
      $region108: #{conv3x3_relu_pallas.1} parent=5 // pred_check
        %p935 = pneg %p934
      $region109: #{conv3x3_relu_pallas.1} parent=5 // pred_check_branch
        %937 = sbr.rel (%p935) target = $region111
      $region110: #{conv3x3_relu_pallas.1} parent=5 // pred_region
        %s938 = ssub.s32 %s10, 2
        // Predicated region
        $region112: #{conv3x3_relu_pallas.1} parent=110 // pred_check
          %p939 = pneg %p155
        $region113: #{conv3x3_relu_pallas.1} parent=110 // pred_check_branch
          %941 = sbr.rel (%p939) target = $region115
        $region114: #{conv3x3_relu_pallas.1} parent=110 // pred_region
          %s942 = smul.u32 3, %s22
          %p943 = scmp.lt.s32.totalorder %s21, 1
          %s944 = scalar_select %p943, %s21, 1
          %p945 = scmp.lt.s32.totalorder %s942, 2
          %s946 = scalar_select %p945, %s942, 2
          %s947 = smul.addr %s944, 3
          %s948 = sadd.s32 %s946, %s947
          %s949 = smul.addr %s948, 4
          %s950 = scalar_lea.vmem %s4, %s949
        $region115: #{conv3x3_relu_pallas.1} parent=110 // pred_fallthru
          _
      $region111: #{conv3x3_relu_pallas.1} parent=5 // pred_fallthru
        _
    $region6: #{conv3x3_relu_pallas.1} parent=1 // loop_footer
      %s14 = sadd.s32 1, %s10
    $region7: #{conv3x3_relu_pallas.1} parent=1 // loop_footer_branch
      %9 = sbr.rel target = $region3
    $region8: #{conv3x3_relu_pallas.1} parent=1 // loop_exit
      _

// kernel: conv3x3_relu_pallas.1
$region0: #{conv3x3_relu_pallas.1}
  #allocation0 [shape = 'u32[]', space=smem, size = 0x4, offset = 0x4, fixed_abs, tag = 'smem constant byte address 0x4 - core index']
  #allocation1 [shape = 'u32[72,128]{1,0:T(1,128)}', space=vmem, size = 0x9000, scoped, tag = 'internal scratch']
  #allocation2 [shape = 'bf16[144,384]{1,0:T(8,128)(2,1)}', space=vmem, size = 0x1b000, scoped, tag = 'scratch operand']
  %s0 = inlined_call_operand.vmem [shape: bf16[2,16,768], index: 0, kind: input, shape index: {}, may-alias: {0,1}]
  %s1 = inlined_call_operand.vmem [shape: bf16[2,16,768], index: 1, kind: input, shape index: {}, may-alias: {0,1}]
  %s2 = inlined_call_operand.vmem [shape: bf16[8,144], index: 2, kind: input, shape index: {}]
  %s3 = inlined_call_operand.vmem [shape: f32[8,1], index: 3, kind: input, shape index: {}]
  %s4 = inlined_call_operand.vmem [shape: bf16[2,8,384], index: 4, kind: output, shape index: {}]
  %s5 = sld [smem:[#allocation0]]
  $region116: #{conv3x3_relu_pallas.1} parent=0
    _
  %s7 = ssub.s32 1, %s5
  %s8 = scalar_select 0, %s7, %s5
  $region1: #{conv3x3_relu_pallas.1} parent=0
    #allocation3 [shape = 'u8[24576]{0}', space=vmem, size = 0x6000, scoped, tag = 'input window, operand 0']
    #allocation4 [shape = 'u8[8192]{0}', space=vmem, size = 0x2000, scoped, tag = 'input window, operand 1']
    loop: start=0, step=1, limit=4
    $region2: #{conv3x3_relu_pallas.1} parent=1 // loop_pre_header
      _
    $region3: #{conv3x3_relu_pallas.1} parent=1 // loop_header
      %s10 = sphi 0, %s14
      %p11 = scmp.ge.s32.totalorder %s10, 4
      %s17 = sphi 0, %s29
      %s18 = sphi 0, %s25
      %s19 = sphi 0, %s17
      %s20 = sphi 0, %s18
      %s21 = sphi 0, %s19
      %s22 = sphi 0, %s20
      %s34 = sphi 0, %s36
      %s37 = sphi 0, %s34
      %s38 = sphi 0, %s37
      %s54 = sphi 0, %s38
      %s66 = sphi 0, %s68
      %s69 = sphi 0, %s66
      %s70 = sphi 0, %s69
      %s86 = sphi 0, %s70
      %s90 = sphi 0, %s90
      %s92 = sphi 0, %s90
      %s93 = sphi 0, %s92
      %s107 = sphi 0, %s93
      %s111 = sphi 0, %s111
      %s113 = sphi 0, %s111
      %s114 = sphi 0, %s113
      %s128 = sphi 0, %s114
      %s136 = sphi 0, %s138
      %s139 = sphi 0, %s136
      %s140 = sphi 0, %s139
      %s156 = sphi 0, %s140
    $region4: #{conv3x3_relu_pallas.1} parent=1 // loop_header_branch
      %13 = sbr.rel (%p11) target = $region8
    $region5: #{conv3x3_relu_pallas.1} parent=1 // loop_body
      %s15 = ssub.s32 %s10, 1
      %s16 = ssub.s32 %s10, 2
      %s23 = sadd.s32 1, %s18
      %p24 = scmp.ge.s32.totalorder %s23, 1
      %s25 = scalar_select %p24, 0, %s23
      %s26 = sadd.s32 1, %s17
      %s27 = scalar_select %p24, %s26, %s17
      %p28 = scmp.ge.s32.totalorder %s27, 2
      %s29 = scalar_select %p28, 0, %s27
      %s30 = ssub.s32 %s17, %s29
      %s31 = ssub.s32 %s18, %s25
      %s32 = sor.u32 %s30, %s31
      %p33 = scmp.eq.s32.totalorder %s32, 0
      %s35 = sadd.s32 %s34, 1
      %s36 = scalar_select %p33, %s34, %s35
      %p39 = pneg %p33
      %p40 = scmp.eq.s32.totalorder %s10, 1
      %p41 = por %p39, %p40
      %p42 = scmp.ne.s32.totalorder %s34, %s37
      %p43 = scmp.eq.s32.totalorder %s10, 0
      %p44 = por %p42, %p43
      %p45 = scmp.ne.s32.totalorder %s34, %s37
      %p46 = scmp.eq.s32.totalorder %s15, 1
      %p47 = por %p45, %p46
      %p48 = scmp.ne.s32.totalorder %s37, %s38
      %p49 = scmp.eq.s32.totalorder %s15, 0
      %p50 = por %p48, %p49
      %p51 = scmp.ne.s32.totalorder %s37, %s38
      %p52 = scmp.eq.s32.totalorder %s16, 1
      %p53 = por %p51, %p52
      %p55 = scmp.ne.s32.totalorder %s38, %s54
      %p56 = scmp.eq.s32.totalorder %s16, 0
      %p57 = por %p55, %p56
      %s58 = sadd.s32 %s18, 1
      %s59 = smul.u32 %s58, 3
      %s60 = sadd.s32 %s25, 1
      %s61 = smul.u32 %s60, 3
      %s62 = ssub.s32 %s17, %s29
      %s63 = ssub.s32 %s59, %s61
      %s64 = sor.u32 %s62, %s63
      %p65 = scmp.eq.s32.totalorder %s64, 0
      %s67 = sadd.s32 %s66, 1
      %s68 = scalar_select %p65, %s66, %s67
      %p71 = pneg %p65
      %p72 = scmp.eq.s32.totalorder %s10, 1
      %p73 = por %p71, %p72
      %p74 = scmp.ne.s32.totalorder %s66, %s69
      %p75 = scmp.eq.s32.totalorder %s10, 0
      %p76 = por %p74, %p75
      %p77 = scmp.ne.s32.totalorder %s66, %s69
      %p78 = scmp.eq.s32.totalorder %s15, 1
      %p79 = por %p77, %p78
      %p80 = scmp.ne.s32.totalorder %s69, %s70
      %p81 = scmp.eq.s32.totalorder %s15, 0
      %p82 = por %p80, %p81
      %p83 = scmp.ne.s32.totalorder %s69, %s70
      %p84 = scmp.eq.s32.totalorder %s16, 1
      %p85 = por %p83, %p84
      %p87 = scmp.ne.s32.totalorder %s70, %s86
      %p88 = scmp.eq.s32.totalorder %s16, 0
      %p89 = por %p87, %p88
      %s91 = sadd.s32 %s90, 1
      %p94 = scmp.eq.s32.totalorder %s10, 1
      %p95 = scmp.ne.s32.totalorder %s90, %s92
      %p96 = scmp.eq.s32.totalorder %s10, 0
      %p97 = por %p95, %p96
      %p98 = scmp.ne.s32.totalorder %s90, %s92
      %p99 = scmp.eq.s32.totalorder %s15, 1
      %p100 = por %p98, %p99
      %p101 = scmp.ne.s32.totalorder %s92, %s93
      %p102 = scmp.eq.s32.totalorder %s15, 0
      %p103 = por %p101, %p102
      %p104 = scmp.ne.s32.totalorder %s92, %s93
      %p105 = scmp.eq.s32.totalorder %s16, 1
      %p106 = por %p104, %p105
      %p108 = scmp.ne.s32.totalorder %s93, %s107
      %p109 = scmp.eq.s32.totalorder %s16, 0
      %p110 = por %p108, %p109
      %s112 = sadd.s32 %s111, 1
      %p115 = scmp.eq.s32.totalorder %s10, 1
      %p116 = scmp.ne.s32.totalorder %s111, %s113
      %p117 = scmp.eq.s32.totalorder %s10, 0
      %p118 = por %p116, %p117
      %p119 = scmp.ne.s32.totalorder %s111, %s113
      %p120 = scmp.eq.s32.totalorder %s15, 1
      %p121 = por %p119, %p120
      %p122 = scmp.ne.s32.totalorder %s113, %s114
      %p123 = scmp.eq.s32.totalorder %s15, 0
      %p124 = por %p122, %p123
      %p125 = scmp.ne.s32.totalorder %s113, %s114
      %p126 = scmp.eq.s32.totalorder %s16, 1
      %p127 = por %p125, %p126
      %p129 = scmp.ne.s32.totalorder %s114, %s128
      %p130 = scmp.eq.s32.totalorder %s16, 0
      %p131 = por %p129, %p130
      %s132 = ssub.s32 %s17, %s29
      %s133 = ssub.s32 %s18, %s25
      %s134 = sor.u32 %s132, %s133
      %p135 = scmp.eq.s32.totalorder %s134, 0
      %s137 = sadd.s32 %s136, 1
      %s138 = scalar_select %p135, %s136, %s137
      %p141 = pneg %p135
      %p142 = scmp.eq.s32.totalorder %s10, 1
      %p143 = por %p141, %p142
      %p144 = scmp.ne.s32.totalorder %s136, %s139
      %p145 = scmp.eq.s32.totalorder %s10, 0
      %p146 = por %p144, %p145
      %p147 = scmp.ne.s32.totalorder %s136, %s139
      %p148 = scmp.eq.s32.totalorder %s15, 1
      %p149 = por %p147, %p148
      %p150 = scmp.ne.s32.totalorder %s139, %s140
      %p151 = scmp.eq.s32.totalorder %s15, 0
      %p152 = por %p150, %p151
      %p153 = scmp.ne.s32.totalorder %s139, %s140
      %p154 = scmp.eq.s32.totalorder %s16, 1
      %p155 = por %p153, %p154
      %p157 = scmp.ne.s32.totalorder %s140, %s156
      %p158 = scmp.eq.s32.totalorder %s16, 0
      %p159 = por %p157, %p158
      %p160 = scmp.le.s32.totalorder 1, %s10
      %p161 = scmp.lt.s32.totalorder %s10, 3
      %p162 = pnand %p160, %p161
      %p163 = pneg %p162
      // Predicated region
      $region9: #{conv3x3_relu_pallas.1} parent=5 // pred_check
        _
      $region10: #{conv3x3_relu_pallas.1} parent=5 // pred_check_branch
        %165 = sbr.rel (%p162) target = $region12
      $region11: #{conv3x3_relu_pallas.1} parent=5 // pred_region
        %s166 = ssub.s32 %s10, 1
        // Predicated region
        $region13: #{conv3x3_relu_pallas.1} parent=11 // pred_check
          %p167 = pneg %p103
        $region14: #{conv3x3_relu_pallas.1} parent=11 // pred_check_branch
          %169 = sbr.rel (%p167) target = $region16
        $region15: #{conv3x3_relu_pallas.1} parent=11 // pred_region
          _
        $region16: #{conv3x3_relu_pallas.1} parent=11 // pred_fallthru
          _
        // Predicated region
        $region17: #{conv3x3_relu_pallas.1} parent=11 // pred_check
          %p170 = pneg %p124
        $region18: #{conv3x3_relu_pallas.1} parent=11 // pred_check_branch
          %172 = sbr.rel (%p170) target = $region20
        $region19: #{conv3x3_relu_pallas.1} parent=11 // pred_region
          _
        $region20: #{conv3x3_relu_pallas.1} parent=11 // pred_fallthru
          _
      $region12: #{conv3x3_relu_pallas.1} parent=5 // pred_fallthru
        _
      %p173 = scmp.lt.s32.totalorder %s10, 2
      // Predicated region
      $region21: #{conv3x3_relu_pallas.1} parent=5 // pred_check
        %p174 = pneg %p173
      $region22: #{conv3x3_relu_pallas.1} parent=5 // pred_check_branch
        %176 = sbr.rel (%p174) target = $region24
      $region23: #{conv3x3_relu_pallas.1} parent=5 // pred_region
        // Predicated region
        $region25: #{conv3x3_relu_pallas.1} parent=23 // pred_check
          %p177 = pneg %p44
        $region26: #{conv3x3_relu_pallas.1} parent=23 // pred_check_branch
          %179 = sbr.rel (%p177) target = $region28
        $region27: #{conv3x3_relu_pallas.1} parent=23 // pred_region
          %s180 = sand.u32 %s34, 1
          %s181 = sand.u32 %s34, 1
          %s182 = smul.addr %s181, 24
          %s183 = scalar_lea.vmem [#allocation3], %s182
          %s184 = smul.u32 3, %s18
          %s185 = smul.addr %s17, 12
          %s186 = sadd.s32 %s184, %s185
          %s187 = smul.addr %s186, 4
          %s188 = scalar_lea.vmem %s0, %s187
          // Predicated region
          $region29: #{conv3x3_relu_pallas.1} parent=27 // pred_check
            _
          $region30: #{conv3x3_relu_pallas.1} parent=27 // pred_check_branch
            %190 = sbr.rel (0) target = $region32
          $region31: #{conv3x3_relu_pallas.1} parent=27 // pred_region
            // Predicated region
            $region33: #{conv3x3_relu_pallas.1} parent=31 // pred_check
              _
            $region34: #{conv3x3_relu_pallas.1} parent=31 // pred_check_branch
              %192 = sbr.rel (0) target = $region36
            $region35: #{conv3x3_relu_pallas.1} parent=31 // pred_region
              %s193 = scalar_lea.vmem %s188, 8
              %s194 = scalar_lea.vmem %s183, 8 [#allocation3]
              loop: start=0, step=1, limit=1
              $region37: #{conv3x3_relu_pallas.1} parent=35 // loop_pre_header
                _
              $region38: #{conv3x3_relu_pallas.1} parent=35 // loop_header
                %s196 = sphi 0, %s200
                %p197 = scmp.ge.s32.totalorder %s196, 1
                %s201 = sphi %s188, %s188
                %s202 = sphi %s183, %s183
              $region39: #{conv3x3_relu_pallas.1} parent=35 // loop_header_branch
                %199 = sbr.rel (%p197) target = $region43
              $region40: #{conv3x3_relu_pallas.1} parent=35 // loop_body
                %v203 = vld [vmem:[%s201] sm:$0xff]
                %204 = vst [vmem:[%s202] sm:$0xff] %v203
                %v205 = vld [vmem:[%s201 + $0x18] sm:$0xff]
                %206 = vst [vmem:[%s202 + $0xc] sm:$0xff] %v205
              $region41: #{conv3x3_relu_pallas.1} parent=35 // loop_footer
                %s200 = sadd.s32 1, %s196
              $region42: #{conv3x3_relu_pallas.1} parent=35 // loop_footer_branch
                %195 = sbr.rel target = $region38
              $region43: #{conv3x3_relu_pallas.1} parent=35 // loop_exit
                _
              %s208 = ssub.s32 16, 1
              loop: start=0, step=1, limit=1
              $region44: #{conv3x3_relu_pallas.1} parent=35 // loop_pre_header
                _
              $region45: #{conv3x3_relu_pallas.1} parent=35 // loop_header
                %s210 = sphi 0, %s214
                %p211 = scmp.ge.s32.totalorder %s210, 1
                %s215 = sphi %s193, %s193
                %s216 = sphi %s194, %s194
              $region46: #{conv3x3_relu_pallas.1} parent=35 // loop_header_branch
                %213 = sbr.rel (%p211) target = $region50
              $region47: #{conv3x3_relu_pallas.1} parent=35 // loop_body
                %v217 = vld [vmem:[%s215] sm:%s208]
                %218 = vst [vmem:[%s216] sm:%s208] %v217
                %v219 = vld [vmem:[%s215 + $0x18] sm:%s208]
                %220 = vst [vmem:[%s216 + $0xc] sm:%s208] %v219
              $region48: #{conv3x3_relu_pallas.1} parent=35 // loop_footer
                %s214 = sadd.s32 1, %s210
              $region49: #{conv3x3_relu_pallas.1} parent=35 // loop_footer_branch
                %209 = sbr.rel target = $region45
              $region50: #{conv3x3_relu_pallas.1} parent=35 // loop_exit
                _
            $region36: #{conv3x3_relu_pallas.1} parent=31 // pred_fallthru
              _
          $region32: #{conv3x3_relu_pallas.1} parent=27 // pred_fallthru
            _
          %221 = vnop
        $region28: #{conv3x3_relu_pallas.1} parent=23 // pred_fallthru
          _
        // Predicated region
        $region51: #{conv3x3_relu_pallas.1} parent=23 // pred_check
          %p222 = pneg %p76
        $region52: #{conv3x3_relu_pallas.1} parent=23 // pred_check_branch
          %224 = sbr.rel (%p222) target = $region54
        $region53: #{conv3x3_relu_pallas.1} parent=23 // pred_region
          %s225 = sand.u32 %s66, 1
          %s226 = sand.u32 %s66, 1
          %s227 = smul.addr %s226, 8
          %s228 = scalar_lea.vmem [#allocation4], %s227
          %s229 = sadd.s32 %s18, 1
          %s230 = smul.u32 %s229, 3
          %s231 = smul.addr %s17, 12
          %s232 = sadd.s32 %s230, %s231
          %s233 = smul.addr %s232, 4
          %s234 = scalar_lea.vmem %s1, %s233
          // Predicated region
          $region55: #{conv3x3_relu_pallas.1} parent=53 // pred_check
            _
          $region56: #{conv3x3_relu_pallas.1} parent=53 // pred_check_branch
            %236 = sbr.rel (0) target = $region58
          $region57: #{conv3x3_relu_pallas.1} parent=53 // pred_region
            // Predicated region
            $region59: #{conv3x3_relu_pallas.1} parent=57 // pred_check
              _
            $region60: #{conv3x3_relu_pallas.1} parent=57 // pred_check_branch
              %238 = sbr.rel target = $region62
            $region61: #{conv3x3_relu_pallas.1} parent=57 // pred_region
              // Predicated region
              $region74: #{conv3x3_relu_pallas.1} parent=61 // pred_check
                _
              $region75: #{conv3x3_relu_pallas.1} parent=61 // pred_check_branch
                %256 = sbr.rel (0) target = $region77
              $region76: #{conv3x3_relu_pallas.1} parent=61 // pred_region
                loop: start=0, step=1, limit=1
                $region78: #{conv3x3_relu_pallas.1} parent=76 // loop_pre_header
                  _
                $region79: #{conv3x3_relu_pallas.1} parent=76 // loop_header
                  %s258 = sphi 0, %s262
                  %p259 = scmp.ge.s32.totalorder %s258, 1
                  %s263 = sphi %s234, %s234
                  %s264 = sphi %s228, %s228
                $region80: #{conv3x3_relu_pallas.1} parent=76 // loop_header_branch
                  %261 = sbr.rel (%p259) target = $region84
                $region81: #{conv3x3_relu_pallas.1} parent=76 // loop_body
                  _
                $region82: #{conv3x3_relu_pallas.1} parent=76 // loop_footer
                  %s262 = sadd.s32 1, %s258
                $region83: #{conv3x3_relu_pallas.1} parent=76 // loop_footer_branch
                  %257 = sbr.rel target = $region79
                $region84: #{conv3x3_relu_pallas.1} parent=76 // loop_exit
                  _
                %s266 = ssub.s32 16, 1
                loop: start=0, step=1, limit=1
                $region85: #{conv3x3_relu_pallas.1} parent=76 // loop_pre_header
                  _
                $region86: #{conv3x3_relu_pallas.1} parent=76 // loop_header
                  %s268 = sphi 0, %s272
                  %p269 = scmp.ge.s32.totalorder %s268, 1
                  %s273 = sphi %s234, %s234
                  %s274 = sphi %s228, %s228
                $region87: #{conv3x3_relu_pallas.1} parent=76 // loop_header_branch
                  %271 = sbr.rel (%p269) target = $region91
                $region88: #{conv3x3_relu_pallas.1} parent=76 // loop_body
                  %v275 = vld [vmem:[%s273] sm:%s266]
                  %276 = vst [vmem:[%s274] sm:%s266] %v275
                  %v277 = vld [vmem:[%s273 + $0x18] sm:%s266]
                  %278 = vst [vmem:[%s274 + $0x4] sm:%s266] %v277
                $region89: #{conv3x3_relu_pallas.1} parent=76 // loop_footer
                  %s272 = sadd.s32 1, %s268
                $region90: #{conv3x3_relu_pallas.1} parent=76 // loop_footer_branch
                  %267 = sbr.rel target = $region86
                $region91: #{conv3x3_relu_pallas.1} parent=76 // loop_exit
                  _
              $region77: #{conv3x3_relu_pallas.1} parent=61 // pred_fallthru
                _
            $region62: #{conv3x3_relu_pallas.1} parent=57 // pred_fallthru
              _
            // Predicated region
            $region63: #{conv3x3_relu_pallas.1} parent=57 // pred_check
              _
            $region64: #{conv3x3_relu_pallas.1} parent=57 // pred_check_branch
              %240 = sbr.rel (0) target = $region66
            $region65: #{conv3x3_relu_pallas.1} parent=57 // pred_region
              %s242 = ssub.s32 16, 1
              loop: start=0, step=1, limit=1
              $region67: #{conv3x3_relu_pallas.1} parent=65 // loop_pre_header
                _
              $region68: #{conv3x3_relu_pallas.1} parent=65 // loop_header
                %s244 = sphi 0, %s248
                %p245 = scmp.ge.s32.totalorder %s244, 1
                %s249 = sphi %s234, %s234
                %s250 = sphi %s228, %s228
              $region69: #{conv3x3_relu_pallas.1} parent=65 // loop_header_branch
                %247 = sbr.rel (%p245) target = $region73
              $region70: #{conv3x3_relu_pallas.1} parent=65 // loop_body
                %v251 = vld [vmem:[%s249] sm:%s242]
                %252 = vst [vmem:[%s250] sm:%s242] %v251
                %v253 = vld [vmem:[%s249 + $0x18] sm:%s242]
                %254 = vst [vmem:[%s250 + $0x4] sm:%s242] %v253
              $region71: #{conv3x3_relu_pallas.1} parent=65 // loop_footer
                %s248 = sadd.s32 1, %s244
              $region72: #{conv3x3_relu_pallas.1} parent=65 // loop_footer_branch
                %243 = sbr.rel target = $region68
              $region73: #{conv3x3_relu_pallas.1} parent=65 // loop_exit
                _
            $region66: #{conv3x3_relu_pallas.1} parent=57 // pred_fallthru
              _
          $region58: #{conv3x3_relu_pallas.1} parent=53 // pred_fallthru
            _
          %279 = vnop
        $region54: #{conv3x3_relu_pallas.1} parent=23 // pred_fallthru
          _
      $region24: #{conv3x3_relu_pallas.1} parent=5 // pred_fallthru
        _
      %p280 = scmp.le.s32.totalorder 1, %s10
      %p281 = scmp.lt.s32.totalorder %s10, 3
      %p282 = pnand %p280, %p281
      %p283 = pneg %p282
      // Predicated region
      $region92: #{conv3x3_relu_pallas.1} parent=5 // pred_check
        _
      $region93: #{conv3x3_relu_pallas.1} parent=5 // pred_check_branch
        %285 = sbr.rel (%p282) target = $region95
      $region94: #{conv3x3_relu_pallas.1} parent=5 // pred_region
        %s286 = ssub.s32 %s10, 1
        %s287 = sand.u32 %s37, 1
        %s288 = sand.u32 %s37, 1
        %s289 = smul.addr %s288, 24
        %s290 = scalar_lea.vmem [#allocation3], %s289
        // Predicated region
        $region96: #{conv3x3_relu_pallas.1} parent=94 // pred_check
          %p291 = pneg %p50
        $region97: #{conv3x3_relu_pallas.1} parent=94 // pred_check_branch
          %293 = sbr.rel (%p291) target = $region99
        $region98: #{conv3x3_relu_pallas.1} parent=94 // pred_region
          _
        $region99: #{conv3x3_relu_pallas.1} parent=94 // pred_fallthru
          _
        %s294 = sand.u32 %s69, 1
        %s295 = sand.u32 %s69, 1
        %s296 = smul.addr %s295, 8
        %s297 = scalar_lea.vmem [#allocation4], %s296
        // Predicated region
        $region100: #{conv3x3_relu_pallas.1} parent=94 // pred_check
          %p298 = pneg %p82
        $region101: #{conv3x3_relu_pallas.1} parent=94 // pred_check_branch
          %300 = sbr.rel (%p298) target = $region103
        $region102: #{conv3x3_relu_pallas.1} parent=94 // pred_region
          _
        $region103: #{conv3x3_relu_pallas.1} parent=94 // pred_fallthru
          _
        %s301 = sand.u32 %s37, 1
        %s302 = sand.u32 %s37, 1
        %s303 = smul.addr %s302, 24
        %s304 = scalar_lea.vmem [#allocation3], %s303
        %p305 = pneg %p50
        %p306 = pneg %p47
        %s307 = sand.u32 %s69, 1
        %s308 = sand.u32 %s69, 1
        %s309 = smul.addr %s308, 8
        %s310 = scalar_lea.vmem [#allocation4], %s309
        %p311 = pneg %p82
        %p312 = pneg %p79
        %p313 = pneg %p103
        %p314 = pneg %p100
        %p315 = pneg %p124
        %p316 = pneg %p121
        %p317 = pneg %p152
        %p318 = pneg %p149
        %s319 = smul.u32 3, %s20
        %p320 = scmp.lt.s32.totalorder %s19, 1
        %s321 = scalar_select %p320, %s19, 1
        %p322 = scmp.lt.s32.totalorder %s319, 2
        %s323 = scalar_select %p322, %s319, 2
        %s324 = smul.addr %s321, 3
        %s325 = sadd.s32 %s323, %s324
        %s326 = smul.addr %s325, 4
        %s327 = scalar_lea.vmem %s4, %s326
        %s328 = smul.u32 3, %s20
        %s329 = sadd.s32 %s20, 1
        %s330 = smul.u32 %s329, 3
        %s331 = smul.u32 3, %s20
        %p332 = scmp.lt.s32.totalorder %s19, 1
        %s333 = scalar_select %p332, %s19, 1
        %p334 = scmp.lt.s32.totalorder %s331, 2
        %s335 = scalar_select %p334, %s331, 2
        %s336 = smul.addr %s333, 3
        %s337 = sadd.s32 %s335, %s336
        %s338 = smul.addr %s337, 4
        %s339 = scalar_lea.vmem %s4, %s338
        %s340 = smul.u32 3, %s20
        %v342 = vld [vmem:[%s290] sm:$0xff]
        %v343 = vld [vmem:[%s290 + $0x8] sm:$0xf]
        %v344 = vld [vmem:[%s290 + $0xc] sm:$0xff]
        %v345 = vld [vmem:[%s290 + $0x14] sm:$0xf]
        %v346 = vld [vmem:[%s297] sm:$0xf]
        %v347 = vld [vmem:[%s297 + $0x4] sm:$0xf]
        %348 = vst [vmem:[#allocation2] sm:$0xff] %v342
        %349 = vst [vmem:[#allocation2 + $0x8] sm:$0xf] %v343
        %350 = vst [vmem:[#allocation2 + $0xc] sm:$0xff] %v344
        %351 = vst [vmem:[#allocation2 + $0x14] sm:$0xf] %v345
        %356 = vrot.lane.b32.xlu0 %v342, 127
        %v357 = vpop.permute.xlu0 %356
        %358 = vrot.lane.b32.xlu0 %v343, 127
        %v359 = vpop.permute.xlu0 %358
        %360 = vrot.lane.b32.xlu0 %v344, 127
        %v361 = vpop.permute.xlu0 %360
        %362 = vrot.lane.b32.xlu0 %v345, 127
        %v363 = vpop.permute.xlu0 %362
        %v364 = vrot.slane %v357, 4
        %v365 = vrot.slane %v359, 4
        %v366 = vrot.slane %v361, 4
        %v367 = vrot.slane %v363, 4
        %vm368 = vcmask 1043456
        %v369 = vsel %vm368, %v364, %v365
        %vm370 = vcmask 1039360
        %v371 = vsel %vm370, %v357, %v369
        %v372 = vsel %vm368, %v366, %v367
        %v373 = vsel %vm370, %v361, %v372
        %378 = vst [vmem:[#allocation2 + $0x18] sm:$0xff] %v371
        %vm379 = vcmask 1035264
        %380 = vst.msk [vmem:[#allocation2 + $0x20] sm:$0xf] %vm379, %v359
        %381 = vst [vmem:[#allocation2 + $0x24] sm:$0xff] %v373
        %382 = vst.msk [vmem:[#allocation2 + $0x2c] sm:$0xf] %vm379, %v363
        %385 = vrot.lane.b32.xlu0 %v346, 127
        %v386 = vpop.permute.xlu0 %385
        %387 = vrot.lane.b32.xlu0 %v347, 127
        %v388 = vpop.permute.xlu0 %387
        %vm391 = vcmask 1044472
        %392 = vst.msk [vmem:[#allocation2 + $0x20] sm:$0xf] %vm391, %v386
        %393 = vst.msk [vmem:[#allocation2 + $0x2c] sm:$0xf] %vm391, %v388
        %394 = vrot.lane.b32.xlu0 %v342, 126
        %v395 = vpop.permute.xlu0 %394
        %396 = vrot.lane.b32.xlu0 %v343, 126
        %v397 = vpop.permute.xlu0 %396
        %398 = vrot.lane.b32.xlu0 %v344, 126
        %v399 = vpop.permute.xlu0 %398
        %400 = vrot.lane.b32.xlu0 %v345, 126
        %v401 = vpop.permute.xlu0 %400
        %v402 = vrot.slane %v395, 4
        %v403 = vrot.slane %v397, 4
        %v404 = vrot.slane %v399, 4
        %v405 = vrot.slane %v401, 4
        %v406 = vsel %vm368, %v402, %v403
        %vm407 = vcmask 1031168
        %v408 = vsel %vm407, %v395, %v406
        %v409 = vsel %vm368, %v404, %v405
        %v410 = vsel %vm407, %v399, %v409
        %415 = vst [vmem:[#allocation2 + $0x30] sm:$0xff] %v408
        %vm416 = vcmask 1027072
        %417 = vst.msk [vmem:[#allocation2 + $0x38] sm:$0xf] %vm416, %v397
        %418 = vst [vmem:[#allocation2 + $0x3c] sm:$0xff] %v410
        %419 = vst.msk [vmem:[#allocation2 + $0x44] sm:$0xf] %vm416, %v401
        %420 = vrot.lane.b32.xlu0 %v346, 126
        %v421 = vpop.permute.xlu0 %420
        %422 = vrot.lane.b32.xlu0 %v347, 126
        %v423 = vpop.permute.xlu0 %422
        %vm426 = vcmask 1044464
        %427 = vst.msk [vmem:[#allocation2 + $0x38] sm:$0xf] %vm426, %v421
        %428 = vst.msk [vmem:[#allocation2 + $0x44] sm:$0xf] %vm426, %v423
        %429 = vrot.lane.b32.xlu0 %v342, 110
        %v430 = vpop.permute.xlu0 %429
        %431 = vrot.lane.b32.xlu0 %v343, 110
        %v432 = vpop.permute.xlu0 %431
        %433 = vrot.lane.b32.xlu0 %v344, 110
        %v434 = vpop.permute.xlu0 %433
        %435 = vrot.lane.b32.xlu0 %v345, 110
        %v436 = vpop.permute.xlu0 %435
        %v437 = vrot.slane %v430, 4
        %v438 = vrot.slane %v432, 4
        %v439 = vrot.slane %v434, 4
        %v440 = vrot.slane %v436, 4
        %v441 = vsel %vm368, %v437, %v438
        %vm442 = vcmask 900096
        %v443 = vsel %vm442, %v430, %v441
        %v444 = vsel %vm368, %v439, %v440
        %v445 = vsel %vm442, %v434, %v444
        %450 = vst [vmem:[#allocation2 + $0x48] sm:$0xff] %v443
        %vm451 = vcmask 896000
        %452 = vst.msk [vmem:[#allocation2 + $0x50] sm:$0xf] %vm451, %v432
        %453 = vst [vmem:[#allocation2 + $0x54] sm:$0xff] %v445
        %454 = vst.msk [vmem:[#allocation2 + $0x5c] sm:$0xf] %vm451, %v436
        %455 = vrot.lane.b32.xlu0 %v346, 110
        %v456 = vpop.permute.xlu0 %455
        %457 = vrot.lane.b32.xlu0 %v347, 110
        %v458 = vpop.permute.xlu0 %457
        %vm461 = vcmask 1044336
        %462 = vst.msk [vmem:[#allocation2 + $0x50] sm:$0xf] %vm461, %v456
        %463 = vst.msk [vmem:[#allocation2 + $0x5c] sm:$0xf] %vm461, %v458
        %464 = vrot.lane.b32.xlu0 %v342, 109
        %v465 = vpop.permute.xlu0 %464
        %466 = vrot.lane.b32.xlu0 %v343, 109
        %v467 = vpop.permute.xlu0 %466
        %468 = vrot.lane.b32.xlu0 %v344, 109
        %v469 = vpop.permute.xlu0 %468
        %470 = vrot.lane.b32.xlu0 %v345, 109
        %v471 = vpop.permute.xlu0 %470
        %v472 = vrot.slane %v465, 4
        %v473 = vrot.slane %v467, 4
        %v474 = vrot.slane %v469, 4
        %v475 = vrot.slane %v471, 4
        %v476 = vsel %vm368, %v472, %v473
        %vm477 = vcmask 891904
        %v478 = vsel %vm477, %v465, %v476
        %v479 = vsel %vm368, %v474, %v475
        %v480 = vsel %vm477, %v469, %v479
        %485 = vst [vmem:[#allocation2 + $0x60] sm:$0xff] %v478
        %vm486 = vcmask 887808
        %487 = vst.msk [vmem:[#allocation2 + $0x68] sm:$0xf] %vm486, %v467
        %488 = vst [vmem:[#allocation2 + $0x6c] sm:$0xff] %v480
        %489 = vst.msk [vmem:[#allocation2 + $0x74] sm:$0xf] %vm486, %v471
        %490 = vrot.lane.b32.xlu0 %v346, 109
        %v491 = vpop.permute.xlu0 %490
        %492 = vrot.lane.b32.xlu0 %v347, 109
        %v493 = vpop.permute.xlu0 %492
        %vm496 = vcmask 1044328
        %497 = vst.msk [vmem:[#allocation2 + $0x68] sm:$0xf] %vm496, %v491
        %498 = vst.msk [vmem:[#allocation2 + $0x74] sm:$0xf] %vm496, %v493
        %499 = vrot.lane.b32.xlu0 %v342, 108
        %v500 = vpop.permute.xlu0 %499
        %501 = vrot.lane.b32.xlu0 %v343, 108
        %v502 = vpop.permute.xlu0 %501
        %503 = vrot.lane.b32.xlu0 %v344, 108
        %v504 = vpop.permute.xlu0 %503
        %505 = vrot.lane.b32.xlu0 %v345, 108
        %v506 = vpop.permute.xlu0 %505
        %v507 = vrot.slane %v500, 4
        %v508 = vrot.slane %v502, 4
        %v509 = vrot.slane %v504, 4
        %v510 = vrot.slane %v506, 4
        %v511 = vsel %vm368, %v507, %v508
        %vm512 = vcmask 883712
        %v513 = vsel %vm512, %v500, %v511
        %v514 = vsel %vm368, %v509, %v510
        %v515 = vsel %vm512, %v504, %v514
        %520 = vst [vmem:[#allocation2 + $0x78] sm:$0xff] %v513
        %vm521 = vcmask 879616
        %522 = vst.msk [vmem:[#allocation2 + $0x80] sm:$0xf] %vm521, %v502
        %523 = vst [vmem:[#allocation2 + $0x84] sm:$0xff] %v515
        %524 = vst.msk [vmem:[#allocation2 + $0x8c] sm:$0xf] %vm521, %v506
        %525 = vrot.lane.b32.xlu0 %v346, 108
        %v526 = vpop.permute.xlu0 %525
        %527 = vrot.lane.b32.xlu0 %v347, 108
        %v528 = vpop.permute.xlu0 %527
        %vm531 = vcmask 1044320
        %532 = vst.msk [vmem:[#allocation2 + $0x80] sm:$0xf] %vm531, %v526
        %533 = vst.msk [vmem:[#allocation2 + $0x8c] sm:$0xf] %vm531, %v528
        %534 = vrot.lane.b32.xlu0 %v342, 92
        %v535 = vpop.permute.xlu0 %534
        %536 = vrot.lane.b32.xlu0 %v343, 92
        %v537 = vpop.permute.xlu0 %536
        %538 = vrot.lane.b32.xlu0 %v344, 92
        %v539 = vpop.permute.xlu0 %538
        %540 = vrot.lane.b32.xlu0 %v345, 92
        %v541 = vpop.permute.xlu0 %540
        %v542 = vrot.slane %v535, 4
        %v543 = vrot.slane %v537, 4
        %v544 = vrot.slane %v539, 4
        %v545 = vrot.slane %v541, 4
        %v546 = vsel %vm368, %v542, %v543
        %vm547 = vcmask 752640
        %v548 = vsel %vm547, %v535, %v546
        %v549 = vsel %vm368, %v544, %v545
        %v550 = vsel %vm547, %v539, %v549
        %555 = vst [vmem:[#allocation2 + $0x90] sm:$0xff] %v548
        %vm556 = vcmask 748544
        %557 = vst.msk [vmem:[#allocation2 + $0x98] sm:$0xf] %vm556, %v537
        %558 = vst [vmem:[#allocation2 + $0x9c] sm:$0xff] %v550
        %559 = vst.msk [vmem:[#allocation2 + $0xa4] sm:$0xf] %vm556, %v541
        %560 = vrot.lane.b32.xlu0 %v346, 92
        %v561 = vpop.permute.xlu0 %560
        %562 = vrot.lane.b32.xlu0 %v347, 92
        %v563 = vpop.permute.xlu0 %562
        %vm566 = vcmask 1044192
        %567 = vst.msk [vmem:[#allocation2 + $0x98] sm:$0xf] %vm566, %v561
        %568 = vst.msk [vmem:[#allocation2 + $0xa4] sm:$0xf] %vm566, %v563
        %569 = vrot.lane.b32.xlu0 %v342, 91
        %v570 = vpop.permute.xlu0 %569
        %571 = vrot.lane.b32.xlu0 %v343, 91
        %v572 = vpop.permute.xlu0 %571
        %573 = vrot.lane.b32.xlu0 %v344, 91
        %v574 = vpop.permute.xlu0 %573
        %575 = vrot.lane.b32.xlu0 %v345, 91
        %v576 = vpop.permute.xlu0 %575
        %v577 = vrot.slane %v570, 4
        %v578 = vrot.slane %v572, 4
        %v579 = vrot.slane %v574, 4
        %v580 = vrot.slane %v576, 4
        %v581 = vsel %vm368, %v577, %v578
        %vm582 = vcmask 744448
        %v583 = vsel %vm582, %v570, %v581
        %v584 = vsel %vm368, %v579, %v580
        %v585 = vsel %vm582, %v574, %v584
        %590 = vst [vmem:[#allocation2 + $0xa8] sm:$0xff] %v583
        %vm591 = vcmask 740352
        %592 = vst.msk [vmem:[#allocation2 + $0xb0] sm:$0xf] %vm591, %v572
        %593 = vst [vmem:[#allocation2 + $0xb4] sm:$0xff] %v585
        %594 = vst.msk [vmem:[#allocation2 + $0xbc] sm:$0xf] %vm591, %v576
        %595 = vrot.lane.b32.xlu0 %v346, 91
        %v596 = vpop.permute.xlu0 %595
        %597 = vrot.lane.b32.xlu0 %v347, 91
        %v598 = vpop.permute.xlu0 %597
        %vm601 = vcmask 1044184
        %602 = vst.msk [vmem:[#allocation2 + $0xb0] sm:$0xf] %vm601, %v596
        %603 = vst.msk [vmem:[#allocation2 + $0xbc] sm:$0xf] %vm601, %v598
        %604 = vrot.lane.b32.xlu0 %v342, 90
        %v605 = vpop.permute.xlu0 %604
        %606 = vrot.lane.b32.xlu0 %v343, 90
        %v607 = vpop.permute.xlu0 %606
        %608 = vrot.lane.b32.xlu0 %v344, 90
        %v609 = vpop.permute.xlu0 %608
        %610 = vrot.lane.b32.xlu0 %v345, 90
        %v611 = vpop.permute.xlu0 %610
        %v612 = vrot.slane %v605, 4
        %v613 = vrot.slane %v607, 4
        %v614 = vrot.slane %v609, 4
        %v615 = vrot.slane %v611, 4
        %v616 = vsel %vm368, %v612, %v613
        %vm617 = vcmask 736256
        %v618 = vsel %vm617, %v605, %v616
        %v619 = vsel %vm368, %v614, %v615
        %v620 = vsel %vm617, %v609, %v619
        %625 = vst [vmem:[#allocation2 + $0xc0] sm:$0xff] %v618
        %vm626 = vcmask 732160
        %627 = vst.msk [vmem:[#allocation2 + $0xc8] sm:$0xf] %vm626, %v607
        %628 = vst [vmem:[#allocation2 + $0xcc] sm:$0xff] %v620
        %629 = vst.msk [vmem:[#allocation2 + $0xd4] sm:$0xf] %vm626, %v611
        %630 = vrot.lane.b32.xlu0 %v346, 90
        %v631 = vpop.permute.xlu0 %630
        %632 = vrot.lane.b32.xlu0 %v347, 90
        %v633 = vpop.permute.xlu0 %632
        %vm636 = vcmask 1044176
        %637 = vst.msk [vmem:[#allocation2 + $0xc8] sm:$0xf] %vm636, %v631
        %638 = vst.msk [vmem:[#allocation2 + $0xd4] sm:$0xf] %vm636, %v633
        %v639 = vld [vmem:[%s2] sm:$0xff]
        %v640 = vld [vmem:[#allocation2] sm:$0xff]
        %v641 = vld [vmem:[#allocation2 + $0x8] sm:$0xf]
        %v642 = vld [vmem:[#allocation2 + $0xc] sm:$0xff]
        %v643 = vld [vmem:[#allocation2 + $0x14] sm:$0xf]
        %v644 = vld [vmem:[#allocation2 + $0x18] sm:$0xff]
        %v645 = vld [vmem:[#allocation2 + $0x20] sm:$0xf]
        %v646 = vld [vmem:[#allocation2 + $0x24] sm:$0xff]
        %v647 = vld [vmem:[#allocation2 + $0x2c] sm:$0xf]
        %v648 = vld [vmem:[#allocation2 + $0x30] sm:$0xff]
        %v649 = vld [vmem:[#allocation2 + $0x38] sm:$0xf]
        %v650 = vld [vmem:[#allocation2 + $0x3c] sm:$0xff]
        %v651 = vld [vmem:[#allocation2 + $0x44] sm:$0xf]
        %v652 = vld [vmem:[#allocation2 + $0x48] sm:$0xff]
        %v653 = vld [vmem:[#allocation2 + $0x50] sm:$0xf]
        %v654 = vld [vmem:[#allocation2 + $0x54] sm:$0xff]
        %v655 = vld [vmem:[#allocation2 + $0x5c] sm:$0xf]
        %v656 = vld [vmem:[#allocation2 + $0x60] sm:$0xff]
        %v657 = vld [vmem:[#allocation2 + $0x68] sm:$0xf]
        %v658 = vld [vmem:[#allocation2 + $0x6c] sm:$0xff]
        %v659 = vld [vmem:[#allocation2 + $0x74] sm:$0xf]
        %v660 = vld [vmem:[#allocation2 + $0x78] sm:$0xff]
        %v661 = vld [vmem:[#allocation2 + $0x80] sm:$0xf]
        %v662 = vld [vmem:[#allocation2 + $0x84] sm:$0xff]
        %v663 = vld [vmem:[#allocation2 + $0x8c] sm:$0xf]
        %v664 = vld [vmem:[#allocation2 + $0x90] sm:$0xff]
        %v665 = vld [vmem:[#allocation2 + $0x98] sm:$0xf]
        %v666 = vld [vmem:[#allocation2 + $0x9c] sm:$0xff]
        %v667 = vld [vmem:[#allocation2 + $0xa4] sm:$0xf]
        %v668 = vld [vmem:[#allocation2 + $0xa8] sm:$0xff]
        %v669 = vld [vmem:[#allocation2 + $0xb0] sm:$0xf]
        %v670 = vld [vmem:[#allocation2 + $0xb4] sm:$0xff]
        %v671 = vld [vmem:[#allocation2 + $0xbc] sm:$0xf]
        %v672 = vld [vmem:[#allocation2 + $0xc0] sm:$0xff]
        %v673 = vld [vmem:[#allocation2 + $0xc8] sm:$0xf]
        %v674 = vld [vmem:[#allocation2 + $0xcc] sm:$0xff]
        %v675 = vld [vmem:[#allocation2 + $0xd4] sm:$0xf]
        %v676 = vld [vmem:[%s3] sm:$0xff]
        %678 = vset.pattern.permute.xlu0 0
        %679 = vperm.xlu0 %678, %v676
        %v680 = vpop.permute.xlu0 %679
        %v683 = vunpack.c.l.b16 %v639
        %v684 = vunpack.c.h.b16 %v639
        %v685 = vpack.c.b16 %v683, %v683
        %v686 = vpack.c.b16 %v684, %v684
        %v724 = vunpack.c.l.b16 %v640
        %v725 = vunpack.c.h.b16 %v640
        %v726 = vunpack.c.l.b16 %v641
        %v727 = vunpack.c.l.b16 %v642
        %v728 = vunpack.c.h.b16 %v642
        %v729 = vunpack.c.l.b16 %v643
        %v730 = vunpack.c.l.b16 %v644
        %v731 = vunpack.c.h.b16 %v644
        %v732 = vunpack.c.l.b16 %v645
        %v733 = vunpack.c.l.b16 %v646
        %v734 = vunpack.c.h.b16 %v646
        %v735 = vunpack.c.l.b16 %v647
        %v736 = vunpack.c.l.b16 %v648
        %v737 = vunpack.c.h.b16 %v648
        %v738 = vunpack.c.l.b16 %v649
        %v739 = vunpack.c.l.b16 %v650
        %v740 = vunpack.c.h.b16 %v650
        %v741 = vunpack.c.l.b16 %v651
        %v742 = vunpack.c.l.b16 %v652
        %v743 = vunpack.c.h.b16 %v652
        %v744 = vunpack.c.l.b16 %v653
        %v745 = vunpack.c.l.b16 %v654
        %v746 = vunpack.c.h.b16 %v654
        %v747 = vunpack.c.l.b16 %v655
        %v748 = vunpack.c.l.b16 %v656
        %v749 = vunpack.c.h.b16 %v656
        %v750 = vunpack.c.l.b16 %v657
        %v751 = vunpack.c.l.b16 %v658
        %v752 = vunpack.c.h.b16 %v658
        %v753 = vunpack.c.l.b16 %v659
        %v754 = vunpack.c.l.b16 %v660
        %v755 = vunpack.c.h.b16 %v660
        %v756 = vunpack.c.l.b16 %v661
        %v757 = vunpack.c.l.b16 %v662
        %v758 = vunpack.c.h.b16 %v662
        %v759 = vunpack.c.l.b16 %v663
        %v760 = vunpack.c.l.b16 %v664
        %v761 = vunpack.c.h.b16 %v664
        %v762 = vunpack.c.l.b16 %v665
        %v763 = vunpack.c.l.b16 %v666
        %v764 = vunpack.c.h.b16 %v666
        %v765 = vunpack.c.l.b16 %v667
        %v766 = vunpack.c.l.b16 %v668
        %v767 = vunpack.c.h.b16 %v668
        %v768 = vunpack.c.l.b16 %v669
        %v769 = vunpack.c.l.b16 %v670
        %v770 = vunpack.c.h.b16 %v670
        %v771 = vunpack.c.l.b16 %v671
        %v772 = vunpack.c.l.b16 %v672
        %v773 = vunpack.c.h.b16 %v672
        %v774 = vunpack.c.l.b16 %v673
        %v775 = vunpack.c.l.b16 %v674
        %v776 = vunpack.c.h.b16 %v674
        %v777 = vunpack.c.l.b16 %v675
        %v778 = vpack.c.b16 %v727, %v724
        %v779 = vpack.c.b16 %v728, %v725
        %v780 = vpack.c.b16 %v729, %v726
        %v781 = vpack.c.b16 %v733, %v730
        %v782 = vpack.c.b16 %v734, %v731
        %v783 = vpack.c.b16 %v735, %v732
        %v784 = vpack.c.b16 %v739, %v736
        %v785 = vpack.c.b16 %v740, %v737
        %v786 = vpack.c.b16 %v741, %v738
        %v787 = vpack.c.b16 %v745, %v742
        %v788 = vpack.c.b16 %v746, %v743
        %v789 = vpack.c.b16 %v747, %v744
        %v790 = vpack.c.b16 %v751, %v748
        %v791 = vpack.c.b16 %v752, %v749
        %v792 = vpack.c.b16 %v753, %v750
        %v793 = vpack.c.b16 %v757, %v754
        %v794 = vpack.c.b16 %v758, %v755
        %v795 = vpack.c.b16 %v759, %v756
        %v796 = vpack.c.b16 %v763, %v760
        %v797 = vpack.c.b16 %v764, %v761
        %v798 = vpack.c.b16 %v765, %v762
        %v799 = vpack.c.b16 %v769, %v766
        %v800 = vpack.c.b16 %v770, %v767
        %v801 = vpack.c.b16 %v771, %v768
        %v802 = vpack.c.b16 %v775, %v772
        %v803 = vpack.c.b16 %v776, %v773
        %v804 = vpack.c.b16 %v777, %v774
        %vm832 = vcmask 130048
        %v834 = vsel %vm832, %v686, 0
        %836 = vmatpush.bf16.msra.mxu0 %v799
        %837 = vmatpush.bf16.msra.mxu0 %v796
        %838 = vmatpush.bf16.msra.mxu0 %v793
        %839 = vmatpush.bf16.msra.mxu0 %v790
        %840 = vmatpush.bf16.msra.mxu0 %v787
        %841 = vmatpush.bf16.msra.mxu0 %v784
        %842 = vmatpush.bf16.msra.mxu0 %v781
        %843 = vmatpush.bf16.msra.mxu0 %v778
        %844 = vmatmul.bf16.gmra.mxu0 %v685
        %v845 = vpop.f32.mrf.mxu0
        %v846 = vadd.f32 %v680, %v845
        %v847 = vpop.f32.mrf.mxu0
        %848 = vdwg.mxu0
        %849 = vmatpush.bf16.msra.mxu0 0
        %850 = vmatpush.bf16.msra.mxu0 0
        %851 = vmatpush.bf16.msra.mxu0 0
        %852 = vmatpush.bf16.msra.mxu0 0
        %853 = vmatpush.bf16.msra.mxu0 0
        %854 = vmatpush.bf16.msra.mxu0 0
        %855 = vmatpush.bf16.msra.mxu0 0
        %856 = vmatpush.bf16.msra.mxu0 %v802
        %857 = vmatmul.bf16.gmra.mxu0 %v834
        %v858 = vpop.f32.mrf.mxu0
        %v859 = vadd.f32 %v846, %v858
        %v860 = vpop.f32.mrf.mxu0
        %861 = vdwg.mxu0
        %862 = vmatpush.bf16.msra.mxu0 %v800
        %863 = vmatpush.bf16.msra.mxu0 %v797
        %864 = vmatpush.bf16.msra.mxu0 %v794
        %865 = vmatpush.bf16.msra.mxu0 %v791
        %866 = vmatpush.bf16.msra.mxu0 %v788
        %867 = vmatpush.bf16.msra.mxu0 %v785
        %868 = vmatpush.bf16.msra.mxu0 %v782
        %869 = vmatpush.bf16.msra.mxu0 %v779
        %870 = vmatmul.bf16.gmra.mxu0 %v685
        %v871 = vpop.f32.mrf.mxu0
        %v872 = vadd.f32 %v680, %v871
        %v873 = vpop.f32.mrf.mxu0
        %874 = vdwg.mxu0
        %875 = vmatpush.bf16.msra.mxu0 0
        %876 = vmatpush.bf16.msra.mxu0 0
        %877 = vmatpush.bf16.msra.mxu0 0
        %878 = vmatpush.bf16.msra.mxu0 0
        %879 = vmatpush.bf16.msra.mxu0 0
        %880 = vmatpush.bf16.msra.mxu0 0
        %881 = vmatpush.bf16.msra.mxu0 0
        %882 = vmatpush.bf16.msra.mxu0 %v803
        %883 = vmatmul.bf16.gmra.mxu0 %v834
        %v884 = vpop.f32.mrf.mxu0
        %v885 = vadd.f32 %v872, %v884
        %v886 = vpop.f32.mrf.mxu0
        %887 = vdwg.mxu0
        %888 = vmatpush.bf16.msra.mxu0 %v801
        %889 = vmatpush.bf16.msra.mxu0 %v798
        %890 = vmatpush.bf16.msra.mxu0 %v795
        %891 = vmatpush.bf16.msra.mxu0 %v792
        %892 = vmatpush.bf16.msra.mxu0 %v789
        %893 = vmatpush.bf16.msra.mxu0 %v786
        %894 = vmatpush.bf16.msra.mxu0 %v783
        %895 = vmatpush.bf16.msra.mxu0 %v780
        %896 = vmatmul.bf16.gmra.mxu0 %v685
        %v897 = vpop.f32.mrf.mxu0
        %v898 = vadd.f32 %v680, %v897
        %v899 = vpop.f32.mrf.mxu0
        %900 = vdwg.mxu0
        %901 = vmatpush.bf16.msra.mxu0 0
        %902 = vmatpush.bf16.msra.mxu0 0
        %903 = vmatpush.bf16.msra.mxu0 0
        %904 = vmatpush.bf16.msra.mxu0 0
        %905 = vmatpush.bf16.msra.mxu0 0
        %906 = vmatpush.bf16.msra.mxu0 0
        %907 = vmatpush.bf16.msra.mxu0 0
        %908 = vmatpush.bf16.msra.mxu0 %v804
        %909 = vmatmul.bf16.gmra.mxu0 %v834
        %v910 = vpop.f32.mrf.mxu0
        %v911 = vadd.f32 %v898, %v910
        %v912 = vpop.f32.mrf.mxu0
        %913 = vdwg.mxu0
        %v914 = vmax.f32 %v859, 0.0
        %v915 = vmax.f32 %v885, 0.0
        %v916 = vmax.f32 %v911, 0.0
        %v917 = vpack.c.bf16 %v915, %v914
        %v918 = vpack.c.bf16 %v916, %v916
        %919 = vst [vmem:[%s339] sm:$0xff] %v917
        %920 = vst [vmem:[%s339 + $0x8] sm:$0xf] %v918
        %s921 = smul.u32 3, %s20
        %p922 = scmp.lt.s32.totalorder %s19, 1
        %s923 = scalar_select %p922, %s19, 1
        %p924 = scmp.lt.s32.totalorder %s921, 2
        %s925 = scalar_select %p924, %s921, 2
        %s926 = smul.addr %s923, 3
        %s927 = sadd.s32 %s925, %s926
        %s928 = smul.addr %s927, 4
        %s929 = scalar_lea.vmem %s4, %s928
        // Predicated region
        $region104: #{conv3x3_relu_pallas.1} parent=94 // pred_check
          %p930 = pneg %p149
        $region105: #{conv3x3_relu_pallas.1} parent=94 // pred_check_branch
          %932 = sbr.rel (%p930) target = $region107
        $region106: #{conv3x3_relu_pallas.1} parent=94 // pred_region
          %s933 = smul.u32 3, %s20
        $region107: #{conv3x3_relu_pallas.1} parent=94 // pred_fallthru
          _
      $region95: #{conv3x3_relu_pallas.1} parent=5 // pred_fallthru
        _
      %p934 = scmp.le.s32.totalorder 2, %s10
      // Predicated region
      $region108: #{conv3x3_relu_pallas.1} parent=5 // pred_check
        %p935 = pneg %p934
      $region109: #{conv3x3_relu_pallas.1} parent=5 // pred_check_branch
        %937 = sbr.rel (%p935) target = $region111
      $region110: #{conv3x3_relu_pallas.1} parent=5 // pred_region
        %s938 = ssub.s32 %s10, 2
        // Predicated region
        $region112: #{conv3x3_relu_pallas.1} parent=110 // pred_check
          %p939 = pneg %p155
        $region113: #{conv3x3_relu_pallas.1} parent=110 // pred_check_branch
          %941 = sbr.rel (%p939) target = $region115
        $region114: #{conv3x3_relu_pallas.1} parent=110 // pred_region
          %s942 = smul.u32 3, %s22
          %p943 = scmp.lt.s32.totalorder %s21, 1
          %s944 = scalar_select %p943, %s21, 1
          %p945 = scmp.lt.s32.totalorder %s942, 2
          %s946 = scalar_select %p945, %s942, 2
          %s947 = smul.addr %s944, 3
          %s948 = sadd.s32 %s946, %s947
          %s949 = smul.addr %s948, 4
          %s950 = scalar_lea.vmem %s4, %s949
        $region115: #{conv3x3_relu_pallas.1} parent=110 // pred_fallthru
          _
      $region111: #{conv3x3_relu_pallas.1} parent=5 // pred_fallthru
        _
    $region6: #{conv3x3_relu_pallas.1} parent=1 // loop_footer
      %s14 = sadd.s32 1, %s10
    $region7: #{conv3x3_relu_pallas.1} parent=1 // loop_footer_branch
      %9 = sbr.rel target = $region3
    $region8: #{conv3x3_relu_pallas.1} parent=1 // loop_exit
      _

</llo_original>
